<compile_context>
chip_gen: v7x
topology: tpu7x:2x2x1
jax: 0.10.0
libtpu: 0.0.40
codegen_flags: <defaults>
</compile_context>

<pallas_src>
import jax
import jax.numpy as jnp
from jax.experimental import pallas as pl
from jax.experimental.pallas import tpu as pltpu

_LANE = 128           # TPU lane width (f32)
_SUBLANE = 8          # f32 sublane count
_DEFAULT_BLOCK_M = 512


def _round_up(x, m):
    return ((x + m - 1) // m) * m


def _mlp_kernel(x_ref, w1_ref, b1_ref, w2_ref, b2_ref, o_ref):
    # fc1: (tm, In) @ (In, Hp) -> (tm, Hp); weights already (in, out) layout.
    h = jnp.dot(
        x_ref[...], w1_ref[...],
        preferred_element_type=jnp.float32,
        precision=jax.lax.Precision.HIGHEST,
    )
    h = jnp.maximum(h + b1_ref[...], 0.0)          # bias + ReLU (VPU)
    # fc2: (tm, Hp) @ (Hp, Out) -> (tm, Out).
    y = jnp.dot(
        h, w2_ref[...],
        preferred_element_type=jnp.float32,
        precision=jax.lax.Precision.HIGHEST,
    )
    o_ref[...] = (y + b2_ref[...]).astype(o_ref.dtype)


def prepare_params(w1, b1, w2, b2):
    """One-time (parameter-load-time) weight prep: pad hidden dim to a multiple
    of 128 and pre-transpose to MXU-friendly (in, out) layout.

    w1: (hidden, in)  b1: (hidden,)  w2: (out, hidden)  b2: (out,)  -- PyTorch layout.
    Padding is numerically exact: padded w1 rows / b1 entries are zero ->
    padded hidden activations are exactly 0 after ReLU -> padded w2 columns
    (also zero) contribute nothing to the output.
    """
    hid, in_f = w1.shape
    out_f = w2.shape[0]
    hid_pad = _round_up(hid, _LANE)

    w1p = jnp.pad(w1, ((0, hid_pad - hid), (0, 0))) if hid_pad != hid else w1
    b1p = jnp.pad(b1, (0, hid_pad - hid)) if hid_pad != hid else b1
    w2p = jnp.pad(w2, ((0, 0), (0, hid_pad - hid))) if hid_pad != hid else w2

    w1t = jnp.asarray(w1p.T)            # (in_f, hid_pad)
    w2t = jnp.asarray(w2p.T)            # (hid_pad, out_f)
    return (w1t, b1p.reshape(1, hid_pad), w2t, b2.reshape(1, out_f))


def _build_and_run(x, w1t, b1p, w2t, b2p, tm, grid_m, vmem_limit,
                   single_buffer_weights):
    B, in_f = x.shape
    hid_pad = w1t.shape[1]
    out_f = w2t.shape[1]

    vmem = pltpu.MemorySpace.VMEM
    res_kwargs = {"memory_space": vmem}
    if single_buffer_weights:
        # Constant index_map -> no overlap to gain from double-buffering.
        res_kwargs["pipeline_mode"] = pl.Buffered(1)

    return pl.pallas_call(
        _mlp_kernel,
        out_shape=jax.ShapeDtypeStruct((B, out_f), jnp.float32),
        grid_spec=pl.GridSpec(
            grid=(grid_m,),
            in_specs=[
                # Streamed activation tile (double-buffered by default).
                pl.BlockSpec((tm, in_f), lambda i: (i, 0), memory_space=vmem),
                # Resident weights / biases (loaded once, reused every tile).
                pl.BlockSpec((in_f, hid_pad), lambda i: (0, 0), **res_kwargs),
                pl.BlockSpec((1, hid_pad), lambda i: (0, 0), **res_kwargs),
                pl.BlockSpec((hid_pad, out_f), lambda i: (0, 0), **res_kwargs),
                pl.BlockSpec((1, out_f), lambda i: (0, 0), **res_kwargs),
            ],
            # True output width (block last dim == full array dim): avoids the
            # wrapper-side slice pass; masked vst is cheap for small out_f.
            out_specs=pl.BlockSpec((tm, out_f), lambda i: (i, 0),
                                   memory_space=vmem),
        ),
        compiler_params=pltpu.CompilerParams(
            dimension_semantics=("parallel",),   # megacore-shardable on v7x
            vmem_limit_bytes=vmem_limit,
        ),
    )(x, w1t, b1p, w2t, b2p)


def simple_fp32_model(x, params, *, block_m=_DEFAULT_BLOCK_M):
    """Forward pass of SimpleFP32Model.  x: (B, in_features) fp32,
    params = prepare_params(w1, b1, w2, b2).  Returns (B, out_features) fp32."""
    w1t, b1p, w2t, b2p = params
    B, in_f = x.shape
    assert w1t.shape[0] == in_f
    hid_pad = w1t.shape[1]
    out_f = w2t.shape[1]

    # ---- batch tile size ----------------------------------------------------
    # >= 2 tiles whenever possible so both v7x TensorCores get work; tiles are
    # multiples of 8 rows (f32 sublane), last tile may be partial (masked).
    if B <= _SUBLANE:
        tm = B
    else:
        tm = min(block_m, _round_up(pl.cdiv(B, 2), _SUBLANE))
        tm = max(tm, _SUBLANE)

    # ---- VMEM budget ----------------------------------------------------------
    # resident weights (single-buffered) + 2x(x tile) + 2x(out tile) + ~2x the
    # (tm, hid_pad) fp32 intermediate.  Keep under ~40 MiB for v7x (64 MiB
    # physical per TC); shrink tm if needed.
    def _need_bytes(tm_):
        f = 4
        w = (in_f * hid_pad + hid_pad * out_f + hid_pad + out_f) * f
        s = (2 * tm_ * in_f + 2 * tm_ * out_f + 2 * tm_ * hid_pad) * f
        return w + s

    while tm > _SUBLANE and _need_bytes(tm) > (40 << 20):
        tm = max(_SUBLANE, _round_up(tm // 2, _SUBLANE))
    # TODO(synk): add an out/K-tiled fallback (grid over out_f and in_f with a
    # pl.when-gated accumulator) for weight sets too large to stay VMEM-resident.

    grid_m = pl.cdiv(B, tm)
    vmem_limit = int(min(max(_need_bytes(tm) * 3 // 2 + (4 << 20), 32 << 20),
                         64 << 20))

    try:
        return _build_and_run(x, w1t, b1p, w2t, b2p, tm, grid_m, vmem_limit,
                              single_buffer_weights=True)
    except Exception:
        # Fallback for JAX versions that reject pl.Buffered(1) on input specs.
        return _build_and_run(x, w1t, b1p, w2t, b2p, tm, grid_m, vmem_limit,
                              single_buffer_weights=False)


if __name__ == "__main__":
    # Small shapes consistent with the module: Linear(in, hidden) -> Linear(hidden, out)
    B, in_features, hidden_features, out_features = 8, 32, 64, 16

    key = jax.random.PRNGKey(0)
    kx, kw1, kb1, kw2, kb2 = jax.random.split(key, 5)

    x = jax.random.normal(kx, (B, in_features), dtype=jnp.float32)
    # PyTorch-style parameter shapes: weight = (out, in)
    w1 = jax.random.normal(kw1, (hidden_features, in_features), dtype=jnp.float32) * 0.1
    b1 = jax.random.normal(kb1, (hidden_features,), dtype=jnp.float32) * 0.1
    w2 = jax.random.normal(kw2, (out_features, hidden_features), dtype=jnp.float32) * 0.1
    b2 = jax.random.normal(kb2, (out_features,), dtype=jnp.float32) * 0.1

    # One-time parameter prep (hoisted out of the forward / per-call path).
    params = prepare_params(w1, b1, w2, b2)

    y = simple_fp32_model(x, params)
    y = jax.block_until_ready(y)

    # Pure-JAX reference (same fp32 precision).
    hp = jax.lax.Precision.HIGHEST
    h_ref = jnp.maximum(jnp.dot(x, w1.T, precision=hp) + b1, 0.0)
    y_ref = jnp.dot(h_ref, w2.T, precision=hp) + b2

    assert y.shape == (B, out_features)
    assert jnp.allclose(y, y_ref, atol=1e-4, rtol=1e-4), "mismatch vs reference"

    print("KERNEL_OK")
</pallas_src>

<mosaic_0001>
module attributes {stable_mosaic.version = 11 : i64} {
  func.func @_mlp_kernel(%arg0: i32, %arg1: memref<8x32xf32, #tpu.memory_space<vmem>>, %arg2: memref<32x128xf32, #tpu.memory_space<vmem>>, %arg3: memref<1x128xf32, #tpu.memory_space<vmem>>, %arg4: memref<128x16xf32, #tpu.memory_space<vmem>>, %arg5: memref<1x16xf32, #tpu.memory_space<vmem>>, %arg6: memref<8x16xf32, #tpu.memory_space<vmem>>) attributes {dimension_semantics = [#tpu.dimension_semantics<parallel>], iteration_bounds = array<i64: 1>, scalar_prefetch = 0 : i64, scratch_operands = 0 : i64, tpu.core_type = #tpu.core_type<tc>, window_params = [{transform_indices = @transform_0, window_bounds = array<i64: 8, 32>}, {pipeline_mode = #tpu.pipeline_mode<synchronous>, transform_indices = @transform_1, window_bounds = array<i64: 32, 128>}, {pipeline_mode = #tpu.pipeline_mode<synchronous>, transform_indices = @transform_2, window_bounds = array<i64: 1, 128>}, {pipeline_mode = #tpu.pipeline_mode<synchronous>, transform_indices = @transform_3, window_bounds = array<i64: 128, 16>}, {pipeline_mode = #tpu.pipeline_mode<synchronous>, transform_indices = @transform_4, window_bounds = array<i64: 1, 16>}, {transform_indices = @transform_5, window_bounds = array<i64: 8, 16>}]} {
    %c0 = arith.constant 0 : index
    %c0_0 = arith.constant 0 : index
    %0 = vector.load %arg1[%c0, %c0_0] : memref<8x32xf32, #tpu.memory_space<vmem>>, vector<8x32xf32>
    %c0_1 = arith.constant 0 : index
    %c0_2 = arith.constant 0 : index
    %1 = vector.load %arg2[%c0_1, %c0_2] : memref<32x128xf32, #tpu.memory_space<vmem>>, vector<32x128xf32>
    %cst = arith.constant dense<0.000000e+00> : vector<8x128xf32>
    %2 = tpu.matmul %0, %1, %cst {dimension_numbers = #tpu.dot_dimension_numbers<[1], [0], [0], [1], [0, 0, 1, 1], [], []>, precision = #tpu.contract_precision<fp32>} : vector<8x32xf32>, vector<32x128xf32>, vector<8x128xf32> -> vector<8x128xf32>
    %c0_3 = arith.constant 0 : index
    %c0_4 = arith.constant 0 : index
    %3 = vector.load %arg3[%c0_3, %c0_4] : memref<1x128xf32, #tpu.memory_space<vmem>>, vector<1x128xf32>
    %4 = vector.broadcast %3 : vector<1x128xf32> to vector<8x128xf32>
    %5 = arith.addf %2, %4 : vector<8x128xf32>
    %cst_5 = arith.constant 0.000000e+00 : f32
    %6 = vector.broadcast %cst_5 : f32 to vector<8x128xf32>
    %7 = arith.maximumf %5, %6 : vector<8x128xf32>
    %c0_6 = arith.constant 0 : index
    %c0_7 = arith.constant 0 : index
    %8 = vector.load %arg4[%c0_6, %c0_7] : memref<128x16xf32, #tpu.memory_space<vmem>>, vector<128x16xf32>
    %cst_8 = arith.constant dense<0.000000e+00> : vector<8x16xf32>
    %9 = tpu.matmul %7, %8, %cst_8 {dimension_numbers = #tpu.dot_dimension_numbers<[1], [0], [0], [1], [0, 0, 1, 1], [], []>, precision = #tpu.contract_precision<fp32>} : vector<8x128xf32>, vector<128x16xf32>, vector<8x16xf32> -> vector<8x16xf32>
    %c0_9 = arith.constant 0 : index
    %c0_10 = arith.constant 0 : index
    %10 = vector.load %arg5[%c0_9, %c0_10] : memref<1x16xf32, #tpu.memory_space<vmem>>, vector<1x16xf32>
    %11 = vector.broadcast %10 : vector<1x16xf32> to vector<8x16xf32>
    %12 = arith.addf %9, %11 : vector<8x16xf32>
    %c0_11 = arith.constant 0 : index
    %c0_12 = arith.constant 0 : index
    %13 = vector.load %arg6[%c0_11, %c0_12] : memref<8x16xf32, #tpu.memory_space<vmem>>, vector<8x16xf32>
    tpu.vector_store %arg6[%c0_11, %c0_12], %12 {strides = array<i32>} : memref<8x16xf32, #tpu.memory_space<vmem>>, vector<8x16xf32>,
    return
  }
  func.func @transform_0(%arg0: i32) -> (i32, i32) {
    %c0_i32 = arith.constant 0 : i32
    %c0_i32_0 = arith.constant 0 : i32
    return %arg0, %c0_i32 : i32, i32
  }
  func.func @transform_1(%arg0: i32) -> (i32, i32) {
    %c0_i32 = arith.constant 0 : i32
    %c0_i32_0 = arith.constant 0 : i32
    %c0_i32_1 = arith.constant 0 : i32
    return %c0_i32, %c0_i32_0 : i32, i32
  }
  func.func @transform_2(%arg0: i32) -> (i32, i32) {
    %c0_i32 = arith.constant 0 : i32
    %c0_i32_0 = arith.constant 0 : i32
    %c0_i32_1 = arith.constant 0 : i32
    return %c0_i32, %c0_i32_0 : i32, i32
  }
  func.func @transform_3(%arg0: i32) -> (i32, i32) {
    %c0_i32 = arith.constant 0 : i32
    %c0_i32_0 = arith.constant 0 : i32
    %c0_i32_1 = arith.constant 0 : i32
    return %c0_i32, %c0_i32_0 : i32, i32
  }
  func.func @transform_4(%arg0: i32) -> (i32, i32) {
    %c0_i32 = arith.constant 0 : i32
    %c0_i32_0 = arith.constant 0 : i32
    %c0_i32_1 = arith.constant 0 : i32
    return %c0_i32, %c0_i32_0 : i32, i32
  }
  func.func @transform_5(%arg0: i32) -> (i32, i32) {
    %c0_i32 = arith.constant 0 : i32
    %c0_i32_0 = arith.constant 0 : i32
    return %arg0, %c0_i32 : i32, i32
  }
}

module attributes {stable_mosaic.version = 11 : i64} {
  func.func @_mlp_kernel(%arg0: i32, %arg1: memref<8x32xf32, #tpu.memory_space<vmem>>, %arg2: memref<32x128xf32, #tpu.memory_space<vmem>>, %arg3: memref<1x128xf32, #tpu.memory_space<vmem>>, %arg4: memref<128x16xf32, #tpu.memory_space<vmem>>, %arg5: memref<1x16xf32, #tpu.memory_space<vmem>>, %arg6: memref<8x16xf32, #tpu.memory_space<vmem>>) attributes {dimension_semantics = [#tpu.dimension_semantics<parallel>], iteration_bounds = array<i64: 1>, scalar_prefetch = 0 : i64, scratch_operands = 0 : i64, tpu.core_type = #tpu.core_type<tc>, window_params = [{transform_indices = @transform_0, window_bounds = array<i64: 8, 32>}, {pipeline_mode = #tpu.pipeline_mode<synchronous>, transform_indices = @transform_1, window_bounds = array<i64: 32, 128>}, {pipeline_mode = #tpu.pipeline_mode<synchronous>, transform_indices = @transform_2, window_bounds = array<i64: 1, 128>}, {pipeline_mode = #tpu.pipeline_mode<synchronous>, transform_indices = @transform_3, window_bounds = array<i64: 128, 16>}, {pipeline_mode = #tpu.pipeline_mode<synchronous>, transform_indices = @transform_4, window_bounds = array<i64: 1, 16>}, {transform_indices = @transform_5, window_bounds = array<i64: 8, 16>}]} {
    %c0 = arith.constant 0 : index
    %c0_0 = arith.constant 0 : index
    %0 = vector.load %arg1[%c0, %c0_0] : memref<8x32xf32, #tpu.memory_space<vmem>>, vector<8x32xf32>
    %c0_1 = arith.constant 0 : index
    %c0_2 = arith.constant 0 : index
    %1 = vector.load %arg2[%c0_1, %c0_2] : memref<32x128xf32, #tpu.memory_space<vmem>>, vector<32x128xf32>
    %cst = arith.constant dense<0.000000e+00> : vector<8x128xf32>
    %2 = tpu.matmul %0, %1, %cst {dimension_numbers = #tpu.dot_dimension_numbers<[1], [0], [0], [1], [0, 0, 1, 1], [], []>, precision = #tpu.contract_precision<fp32>} : vector<8x32xf32>, vector<32x128xf32>, vector<8x128xf32> -> vector<8x128xf32>
    %c0_3 = arith.constant 0 : index
    %c0_4 = arith.constant 0 : index
    %3 = vector.load %arg3[%c0_3, %c0_4] : memref<1x128xf32, #tpu.memory_space<vmem>>, vector<1x128xf32>
    %4 = vector.broadcast %3 : vector<1x128xf32> to vector<8x128xf32>
    %5 = arith.addf %2, %4 : vector<8x128xf32>
    %cst_5 = arith.constant 0.000000e+00 : f32
    %6 = vector.broadcast %cst_5 : f32 to vector<8x128xf32>
    %7 = arith.maximumf %5, %6 : vector<8x128xf32>
    %c0_6 = arith.constant 0 : index
    %c0_7 = arith.constant 0 : index
    %8 = vector.load %arg4[%c0_6, %c0_7] : memref<128x16xf32, #tpu.memory_space<vmem>>, vector<128x16xf32>
    %cst_8 = arith.constant dense<0.000000e+00> : vector<8x16xf32>
    %9 = tpu.matmul %7, %8, %cst_8 {dimension_numbers = #tpu.dot_dimension_numbers<[1], [0], [0], [1], [0, 0, 1, 1], [], []>, precision = #tpu.contract_precision<fp32>} : vector<8x128xf32>, vector<128x16xf32>, vector<8x16xf32> -> vector<8x16xf32>
    %c0_9 = arith.constant 0 : index
    %c0_10 = arith.constant 0 : index
    %10 = vector.load %arg5[%c0_9, %c0_10] : memref<1x16xf32, #tpu.memory_space<vmem>>, vector<1x16xf32>
    %11 = vector.broadcast %10 : vector<1x16xf32> to vector<8x16xf32>
    %12 = arith.addf %9, %11 : vector<8x16xf32>
    %c0_11 = arith.constant 0 : index
    %c0_12 = arith.constant 0 : index
    %13 = vector.load %arg6[%c0_11, %c0_12] : memref<8x16xf32, #tpu.memory_space<vmem>>, vector<8x16xf32>
    tpu.vector_store %arg6[%c0_11, %c0_12], %12 {strides = array<i32>} : memref<8x16xf32, #tpu.memory_space<vmem>>, vector<8x16xf32>,
    return
  }
  func.func @transform_0(%arg0: i32) -> (i32, i32) {
    %c0_i32 = arith.constant 0 : i32
    %c0_i32_0 = arith.constant 0 : i32
    return %arg0, %c0_i32 : i32, i32
  }
  func.func @transform_1(%arg0: i32) -> (i32, i32) {
    %c0_i32 = arith.constant 0 : i32
    %c0_i32_0 = arith.constant 0 : i32
    %c0_i32_1 = arith.constant 0 : i32
    return %c0_i32, %c0_i32_0 : i32, i32
  }
  func.func @transform_2(%arg0: i32) -> (i32, i32) {
    %c0_i32 = arith.constant 0 : i32
    %c0_i32_0 = arith.constant 0 : i32
    %c0_i32_1 = arith.constant 0 : i32
    return %c0_i32, %c0_i32_0 : i32, i32
  }
  func.func @transform_3(%arg0: i32) -> (i32, i32) {
    %c0_i32 = arith.constant 0 : i32
    %c0_i32_0 = arith.constant 0 : i32
    %c0_i32_1 = arith.constant 0 : i32
    return %c0_i32, %c0_i32_0 : i32, i32
  }
  func.func @transform_4(%arg0: i32) -> (i32, i32) {
    %c0_i32 = arith.constant 0 : i32
    %c0_i32_0 = arith.constant 0 : i32
    %c0_i32_1 = arith.constant 0 : i32
    return %c0_i32, %c0_i32_0 : i32, i32
  }
  func.func @transform_5(%arg0: i32) -> (i32, i32) {
    %c0_i32 = arith.constant 0 : i32
    %c0_i32_0 = arith.constant 0 : i32
    return %arg0, %c0_i32 : i32, i32
  }
}

</mosaic_0001>

<llo_original>
// kernel: tpu_custom_call.1
$region0: #{tpu_custom_call.1}
  #allocation0 [shape = 'u32[]', space=smem, size = 0x4, offset = 0x4, fixed_abs, tag = 'smem constant byte address 0x4 - core index']
  #allocation1 [shape = 'u32[144,128]{1,0:T(1,128)}', space=vmem, size = 0x12000, scoped, tag = 'internal scratch']
  %s0 = inlined_call_operand.vmem [shape: f32[8,32], index: 0, kind: input, shape index: {}]
  %s1 = inlined_call_operand.vmem [shape: f32[32,128], index: 1, kind: input, shape index: {}]
  %s2 = inlined_call_operand.vmem [shape: f32[1,128], index: 2, kind: input, shape index: {}]
  %s3 = inlined_call_operand.vmem [shape: f32[128,16], index: 3, kind: input, shape index: {}]
  %s4 = inlined_call_operand.vmem [shape: f32[1,16], index: 4, kind: input, shape index: {}]
  %s5 = inlined_call_operand.hbm [shape: f32[8,16], index: 5, kind: output, shape index: {}]
  %s6 = sld [smem:[#allocation0]]
  $region30: #{tpu_custom_call.1} parent=0
    _
  %s8 = ssub.s32 1, %s6
  %s9 = scalar_select 0, %s8, %s6
  $region1: #{tpu_custom_call.1} parent=0
    #allocation2 [shape = 'u8[4096]{0}', space=vmem, size = 0x1000, scoped, tag = 'output window, operand 0, single buffered']
    #allocation3 [shape = 's32[1]{0}', space=sflag, size = 0x4, scoped, tag = 'scoped memory for tpu_custom_call.1']
    %10 = vsyncpa [#allocation3], 0
    // Predicated region
    $region2: #{tpu_custom_call.1} parent=1 // pred_check
      _
    $region3: #{tpu_custom_call.1} parent=1 // pred_check_branch
      %12 = sbr.rel (0) target = $region5
    $region4: #{tpu_custom_call.1} parent=1 // pred_region
      _
    $region5: #{tpu_custom_call.1} parent=1 // pred_fallthru
      _
    // Predicated region
    $region6: #{tpu_custom_call.1} parent=1 // pred_check
      _
    $region7: #{tpu_custom_call.1} parent=1 // pred_check_branch
      %14 = sbr.rel (0) target = $region9
    $region8: #{tpu_custom_call.1} parent=1 // pred_region
      _
    $region9: #{tpu_custom_call.1} parent=1 // pred_fallthru
      _
    // Predicated region
    $region10: #{tpu_custom_call.1} parent=1 // pred_check
      _
    $region11: #{tpu_custom_call.1} parent=1 // pred_check_branch
      %16 = sbr.rel (0) target = $region13
    $region12: #{tpu_custom_call.1} parent=1 // pred_region
      _
    $region13: #{tpu_custom_call.1} parent=1 // pred_fallthru
      _
    // Predicated region
    $region14: #{tpu_custom_call.1} parent=1 // pred_check
      _
    $region15: #{tpu_custom_call.1} parent=1 // pred_check_branch
      %18 = sbr.rel (0) target = $region17
    $region16: #{tpu_custom_call.1} parent=1 // pred_region
      _
    $region17: #{tpu_custom_call.1} parent=1 // pred_fallthru
      _
    // Predicated region
    $region18: #{tpu_custom_call.1} parent=1 // pred_check
      _
    $region19: #{tpu_custom_call.1} parent=1 // pred_check_branch
      %20 = sbr.rel (0) target = $region21
    $region20: #{tpu_custom_call.1} parent=1 // pred_region
      _
    $region21: #{tpu_custom_call.1} parent=1 // pred_fallthru
      _
    %v21 = vld [vmem:[%s0] sm:$0xff]
    %v22 = vld [vmem:[%s1] sm:$0xff]
    %v23 = vld [vmem:[%s1 + $0x8] sm:$0xff]
    %v24 = vld [vmem:[%s1 + $0x10] sm:$0xff]
    %v25 = vld [vmem:[%s1 + $0x18] sm:$0xff]
    %v26 = vld [vmem:[%s2] sm:$0x1]
    %v28 = vlaneseq
    %v29 = vshrl.u32 %v28, 7
    %v30 = vsub.s32 0, %v29
    %v31 = vrot.slane %v26, %v30
    %vm33 = vcmask 261120
    %v35 = vsel %vm33, %v21, 0
    %37 = vmatprep.subr.mxu0 0.0
    %v38 = vand.u32 %v22, 4294901760
    %39 = vmatpush1.msra.mxu0 %v38
    %40 = vmatprep.subr.mxu0 0.0
    %v41 = vand.u32 %v23, 4294901760
    %42 = vmatpush1.msra.mxu0 %v41
    %43 = vmatprep.subr.mxu0 0.0
    %v44 = vand.u32 %v24, 4294901760
    %45 = vmatpush1.msra.mxu0 %v44
    %46 = vmatprep.subr.mxu0 0.0
    %v47 = vand.u32 %v25, 4294901760
    %48 = vmatpush1.msra.mxu0 %v47
    %49 = vmatprep.subr.mxu0 0.0
    %50 = vmatpush1.msra.mxu0 0.0
    %51 = vmatprep.subr.mxu0 0.0
    %52 = vmatpush1.msra.mxu0 0.0
    %53 = vmatprep.subr.mxu0 0.0
    %54 = vmatpush1.msra.mxu0 0.0
    %55 = vmatprep.subr.mxu0 0.0
    %56 = vmatpush1.msra.mxu0 0.0
    %57 = vmatprep.subr.mxu0 0.0
    %58 = vmatpush1.msra.mxu0 0.0
    %59 = vmatprep.subr.mxu0 0.0
    %60 = vmatpush1.msra.mxu0 0.0
    %61 = vmatprep.subr.mxu0 0.0
    %62 = vmatpush1.msra.mxu0 0.0
    %63 = vmatprep.subr.mxu0 0.0
    %64 = vmatpush1.msra.mxu0 0.0
    %65 = vmatprep.subr.mxu0 0.0
    %66 = vmatpush1.msra.mxu0 0.0
    %67 = vmatprep.subr.mxu0 0.0
    %68 = vmatpush1.msra.mxu0 0.0
    %69 = vmatprep.subr.mxu0 0.0
    %70 = vmatpush1.msra.mxu0 0.0
    %71 = vmatprep.subr.mxu0 0.0
    %72 = vmatpush1.msra.mxu0 0.0
    %73 = vmatprep.subr.mxu0 0.0
    %74 = vmatpush1.msra.mxu0 0.0
    %75 = vmatprep.subr.mxu0 0.0
    %76 = vmatpush1.msra.mxu0 0.0
    %77 = vmatprep.subr.mxu0 0.0
    %78 = vmatpush1.msra.mxu0 0.0
    %79 = vmatprep.subr.mxu0 0.0
    %80 = vmatpush1.msra.mxu0 0.0
    %81 = vmatprep.subr.mxu0 0.0
    %82 = vmatpush1.msra.mxu0 0.0
    %83 = vmatprep.subr.mxu0 0.0
    %84 = vmatpush1.msra.mxu0 0.0
    %85 = vmatprep.subr.mxu0 0.0
    %86 = vmatpush1.msra.mxu0 0.0
    %87 = vmatprep.subr.mxu0 0.0
    %88 = vmatpush1.msra.mxu0 0.0
    %89 = vmatprep.subr.mxu0 0.0
    %90 = vmatpush1.msra.mxu0 0.0
    %91 = vmatprep.subr.mxu0 0.0
    %92 = vmatpush1.msra.mxu0 0.0
    %93 = vmatprep.subr.mxu0 0.0
    %94 = vmatpush1.msra.mxu0 0.0
    %95 = vmatprep.subr.mxu0 0.0
    %96 = vmatpush1.msra.mxu0 0.0
    %97 = vmatprep.subr.mxu0 0.0
    %98 = vmatpush1.msra.mxu0 0.0
    %99 = vmatprep.subr.mxu0 0.0
    %100 = vmatpush1.msra.mxu0 0.0
    %101 = vmatprep.subr.mxu0 0.0
    %102 = vmatpush1.msra.mxu0 0.0
    %103 = vmatprep.subr.mxu0 0.0
    %104 = vmatpush1.msra.mxu0 0.0
    %105 = vmatprep.mubr.f32.mxu0 0.0
    %v106 = vand.u32 %v35, 4294901760
    %v107 = vsub.f32 %v35, %v106
    %v108 = vand.u32 %v107, 4294901760
    %v109 = vsub.f32 %v107, %v108
    %v110 = vand.u32 %v109, 4294901760
    %111 = vmatmul.mubr.f32.gmra.mrb[0].mxu0 %v110
    %v112 = vpop.f32.mrb[0].mxu0
    %v113 = vadd.f32 %v31, %v112
    %v114 = vpop.f32.mrb[0].mxu0
    %115 = vdwg.mxu0
    %116 = vmatprep.subr.mxu0 0.0
    %v117 = vand.u32 %v22, 4294901760
    %v118 = vsub.f32 %v22, %v117
    %v119 = vand.u32 %v118, 4294901760
    %v120 = vsub.f32 %v118, %v119
    %v121 = vand.u32 %v120, 4294901760
    %122 = vmatpush1.msra.mxu0 %v121
    %123 = vmatprep.subr.mxu0 0.0
    %v124 = vand.u32 %v23, 4294901760
    %v125 = vsub.f32 %v23, %v124
    %v126 = vand.u32 %v125, 4294901760
    %v127 = vsub.f32 %v125, %v126
    %v128 = vand.u32 %v127, 4294901760
    %129 = vmatpush1.msra.mxu0 %v128
    %130 = vmatprep.subr.mxu0 0.0
    %v131 = vand.u32 %v24, 4294901760
    %v132 = vsub.f32 %v24, %v131
    %v133 = vand.u32 %v132, 4294901760
    %v134 = vsub.f32 %v132, %v133
    %v135 = vand.u32 %v134, 4294901760
    %136 = vmatpush1.msra.mxu0 %v135
    %137 = vmatprep.subr.mxu0 0.0
    %v138 = vand.u32 %v25, 4294901760
    %v139 = vsub.f32 %v25, %v138
    %v140 = vand.u32 %v139, 4294901760
    %v141 = vsub.f32 %v139, %v140
    %v142 = vand.u32 %v141, 4294901760
    %143 = vmatpush1.msra.mxu0 %v142
    %144 = vmatprep.subr.mxu0 0.0
    %145 = vmatpush1.msra.mxu0 0.0
    %146 = vmatprep.subr.mxu0 0.0
    %147 = vmatpush1.msra.mxu0 0.0
    %148 = vmatprep.subr.mxu0 0.0
    %149 = vmatpush1.msra.mxu0 0.0
    %150 = vmatprep.subr.mxu0 0.0
    %151 = vmatpush1.msra.mxu0 0.0
    %152 = vmatprep.subr.mxu0 0.0
    %153 = vmatpush1.msra.mxu0 0.0
    %154 = vmatprep.subr.mxu0 0.0
    %155 = vmatpush1.msra.mxu0 0.0
    %156 = vmatprep.subr.mxu0 0.0
    %157 = vmatpush1.msra.mxu0 0.0
    %158 = vmatprep.subr.mxu0 0.0
    %159 = vmatpush1.msra.mxu0 0.0
    %160 = vmatprep.subr.mxu0 0.0
    %161 = vmatpush1.msra.mxu0 0.0
    %162 = vmatprep.subr.mxu0 0.0
    %163 = vmatpush1.msra.mxu0 0.0
    %164 = vmatprep.subr.mxu0 0.0
    %165 = vmatpush1.msra.mxu0 0.0
    %166 = vmatprep.subr.mxu0 0.0
    %167 = vmatpush1.msra.mxu0 0.0
    %168 = vmatprep.subr.mxu0 0.0
    %169 = vmatpush1.msra.mxu0 0.0
    %170 = vmatprep.subr.mxu0 0.0
    %171 = vmatpush1.msra.mxu0 0.0
    %172 = vmatprep.subr.mxu0 0.0
    %173 = vmatpush1.msra.mxu0 0.0
    %174 = vmatprep.subr.mxu0 0.0
    %175 = vmatpush1.msra.mxu0 0.0
    %176 = vmatprep.subr.mxu0 0.0
    %177 = vmatpush1.msra.mxu0 0.0
    %178 = vmatprep.subr.mxu0 0.0
    %179 = vmatpush1.msra.mxu0 0.0
    %180 = vmatprep.subr.mxu0 0.0
    %181 = vmatpush1.msra.mxu0 0.0
    %182 = vmatprep.subr.mxu0 0.0
    %183 = vmatpush1.msra.mxu0 0.0
    %184 = vmatprep.subr.mxu0 0.0
    %185 = vmatpush1.msra.mxu0 0.0
    %186 = vmatprep.subr.mxu0 0.0
    %187 = vmatpush1.msra.mxu0 0.0
    %188 = vmatprep.subr.mxu0 0.0
    %189 = vmatpush1.msra.mxu0 0.0
    %190 = vmatprep.subr.mxu0 0.0
    %191 = vmatpush1.msra.mxu0 0.0
    %192 = vmatprep.subr.mxu0 0.0
    %193 = vmatpush1.msra.mxu0 0.0
    %194 = vmatprep.subr.mxu0 0.0
    %195 = vmatpush1.msra.mxu0 0.0
    %196 = vmatprep.subr.mxu0 0.0
    %197 = vmatpush1.msra.mxu0 0.0
    %198 = vmatprep.subr.mxu0 0.0
    %199 = vmatpush1.msra.mxu0 0.0
    %200 = vmatprep.mubr.f32.mxu0 0.0
    %v201 = vand.u32 %v35, 4294901760
    %202 = vmatmul.mubr.f32.gmra.mrb[0].mxu0 %v201
    %v203 = vpop.f32.mrb[0].mxu0
    %v204 = vadd.f32 %v113, %v203
    %v205 = vpop.f32.mrb[0].mxu0
    %206 = vdwg.mxu0
    %207 = vmatprep.subr.mxu0 0.0
    %v208 = vand.u32 %v22, 4294901760
    %v209 = vsub.f32 %v22, %v208
    %210 = vmatpush1.msra.mxu0 %v209
    %211 = vmatprep.subr.mxu0 0.0
    %v212 = vand.u32 %v23, 4294901760
    %v213 = vsub.f32 %v23, %v212
    %214 = vmatpush1.msra.mxu0 %v213
    %215 = vmatprep.subr.mxu0 0.0
    %v216 = vand.u32 %v24, 4294901760
    %v217 = vsub.f32 %v24, %v216
    %218 = vmatpush1.msra.mxu0 %v217
    %219 = vmatprep.subr.mxu0 0.0
    %v220 = vand.u32 %v25, 4294901760
    %v221 = vsub.f32 %v25, %v220
    %222 = vmatpush1.msra.mxu0 %v221
    %223 = vmatprep.subr.mxu0 0.0
    %224 = vmatpush1.msra.mxu0 0.0
    %225 = vmatprep.subr.mxu0 0.0
    %226 = vmatpush1.msra.mxu0 0.0
    %227 = vmatprep.subr.mxu0 0.0
    %228 = vmatpush1.msra.mxu0 0.0
    %229 = vmatprep.subr.mxu0 0.0
    %230 = vmatpush1.msra.mxu0 0.0
    %231 = vmatprep.subr.mxu0 0.0
    %232 = vmatpush1.msra.mxu0 0.0
    %233 = vmatprep.subr.mxu0 0.0
    %234 = vmatpush1.msra.mxu0 0.0
    %235 = vmatprep.subr.mxu0 0.0
    %236 = vmatpush1.msra.mxu0 0.0
    %237 = vmatprep.subr.mxu0 0.0
    %238 = vmatpush1.msra.mxu0 0.0
    %239 = vmatprep.subr.mxu0 0.0
    %240 = vmatpush1.msra.mxu0 0.0
    %241 = vmatprep.subr.mxu0 0.0
    %242 = vmatpush1.msra.mxu0 0.0
    %243 = vmatprep.subr.mxu0 0.0
    %244 = vmatpush1.msra.mxu0 0.0
    %245 = vmatprep.subr.mxu0 0.0
    %246 = vmatpush1.msra.mxu0 0.0
    %247 = vmatprep.subr.mxu0 0.0
    %248 = vmatpush1.msra.mxu0 0.0
    %249 = vmatprep.subr.mxu0 0.0
    %250 = vmatpush1.msra.mxu0 0.0
    %251 = vmatprep.subr.mxu0 0.0
    %252 = vmatpush1.msra.mxu0 0.0
    %253 = vmatprep.subr.mxu0 0.0
    %254 = vmatpush1.msra.mxu0 0.0
    %255 = vmatprep.subr.mxu0 0.0
    %256 = vmatpush1.msra.mxu0 0.0
    %257 = vmatprep.subr.mxu0 0.0
    %258 = vmatpush1.msra.mxu0 0.0
    %259 = vmatprep.subr.mxu0 0.0
    %260 = vmatpush1.msra.mxu0 0.0
    %261 = vmatprep.subr.mxu0 0.0
    %262 = vmatpush1.msra.mxu0 0.0
    %263 = vmatprep.subr.mxu0 0.0
    %264 = vmatpush1.msra.mxu0 0.0
    %265 = vmatprep.subr.mxu0 0.0
    %266 = vmatpush1.msra.mxu0 0.0
    %267 = vmatprep.subr.mxu0 0.0
    %268 = vmatpush1.msra.mxu0 0.0
    %269 = vmatprep.subr.mxu0 0.0
    %270 = vmatpush1.msra.mxu0 0.0
    %271 = vmatprep.subr.mxu0 0.0
    %272 = vmatpush1.msra.mxu0 0.0
    %273 = vmatprep.subr.mxu0 0.0
    %274 = vmatpush1.msra.mxu0 0.0
    %275 = vmatprep.subr.mxu0 0.0
    %276 = vmatpush1.msra.mxu0 0.0
    %277 = vmatprep.subr.mxu0 0.0
    %278 = vmatpush1.msra.mxu0 0.0
    %279 = vmatprep.mubr.f32.mxu0 0.0
    %v280 = vand.u32 %v35, 4294901760
    %v281 = vsub.f32 %v35, %v280
    %282 = vmatmul.mubr.f32.gmra.mrb[0].mxu0 %v281
    %v283 = vpop.f32.mrb[0].mxu0
    %v284 = vadd.f32 %v204, %v283
    %v285 = vpop.f32.mrb[0].mxu0
    %286 = vdwg.mxu0
    %287 = vmatprep.subr.mxu0 0.0
    %v288 = vand.u32 %v22, 4294901760
    %289 = vmatpush1.msra.mxu0 %v288
    %290 = vmatprep.subr.mxu0 0.0
    %v291 = vand.u32 %v23, 4294901760
    %292 = vmatpush1.msra.mxu0 %v291
    %293 = vmatprep.subr.mxu0 0.0
    %v294 = vand.u32 %v24, 4294901760
    %295 = vmatpush1.msra.mxu0 %v294
    %296 = vmatprep.subr.mxu0 0.0
    %v297 = vand.u32 %v25, 4294901760
    %298 = vmatpush1.msra.mxu0 %v297
    %299 = vmatprep.subr.mxu0 0.0
    %300 = vmatpush1.msra.mxu0 0.0
    %301 = vmatprep.subr.mxu0 0.0
    %302 = vmatpush1.msra.mxu0 0.0
    %303 = vmatprep.subr.mxu0 0.0
    %304 = vmatpush1.msra.mxu0 0.0
    %305 = vmatprep.subr.mxu0 0.0
    %306 = vmatpush1.msra.mxu0 0.0
    %307 = vmatprep.subr.mxu0 0.0
    %308 = vmatpush1.msra.mxu0 0.0
    %309 = vmatprep.subr.mxu0 0.0
    %310 = vmatpush1.msra.mxu0 0.0
    %311 = vmatprep.subr.mxu0 0.0
    %312 = vmatpush1.msra.mxu0 0.0
    %313 = vmatprep.subr.mxu0 0.0
    %314 = vmatpush1.msra.mxu0 0.0
    %315 = vmatprep.subr.mxu0 0.0
    %316 = vmatpush1.msra.mxu0 0.0
    %317 = vmatprep.subr.mxu0 0.0
    %318 = vmatpush1.msra.mxu0 0.0
    %319 = vmatprep.subr.mxu0 0.0
    %320 = vmatpush1.msra.mxu0 0.0
    %321 = vmatprep.subr.mxu0 0.0
    %322 = vmatpush1.msra.mxu0 0.0
    %323 = vmatprep.subr.mxu0 0.0
    %324 = vmatpush1.msra.mxu0 0.0
    %325 = vmatprep.subr.mxu0 0.0
    %326 = vmatpush1.msra.mxu0 0.0
    %327 = vmatprep.subr.mxu0 0.0
    %328 = vmatpush1.msra.mxu0 0.0
    %329 = vmatprep.subr.mxu0 0.0
    %330 = vmatpush1.msra.mxu0 0.0
    %331 = vmatprep.subr.mxu0 0.0
    %332 = vmatpush1.msra.mxu0 0.0
    %333 = vmatprep.subr.mxu0 0.0
    %334 = vmatpush1.msra.mxu0 0.0
    %335 = vmatprep.subr.mxu0 0.0
    %336 = vmatpush1.msra.mxu0 0.0
    %337 = vmatprep.subr.mxu0 0.0
    %338 = vmatpush1.msra.mxu0 0.0
    %339 = vmatprep.subr.mxu0 0.0
    %340 = vmatpush1.msra.mxu0 0.0
    %341 = vmatprep.subr.mxu0 0.0
    %342 = vmatpush1.msra.mxu0 0.0
    %343 = vmatprep.subr.mxu0 0.0
    %344 = vmatpush1.msra.mxu0 0.0
    %345 = vmatprep.subr.mxu0 0.0
    %346 = vmatpush1.msra.mxu0 0.0
    %347 = vmatprep.subr.mxu0 0.0
    %348 = vmatpush1.msra.mxu0 0.0
    %349 = vmatprep.subr.mxu0 0.0
    %350 = vmatpush1.msra.mxu0 0.0
    %351 = vmatprep.subr.mxu0 0.0
    %352 = vmatpush1.msra.mxu0 0.0
    %353 = vmatprep.subr.mxu0 0.0
    %354 = vmatpush1.msra.mxu0 0.0
    %355 = vmatprep.mubr.f32.mxu0 0.0
    %v356 = vand.u32 %v35, 4294901760
    %v357 = vsub.f32 %v35, %v356
    %v358 = vand.u32 %v357, 4294901760
    %359 = vmatmul.mubr.f32.gmra.mrb[0].mxu0 %v358
    %v360 = vpop.f32.mrb[0].mxu0
    %v361 = vadd.f32 %v284, %v360
    %v362 = vpop.f32.mrb[0].mxu0
    %363 = vdwg.mxu0
    %364 = vmatprep.subr.mxu0 0.0
    %v365 = vand.u32 %v22, 4294901760
    %v366 = vsub.f32 %v22, %v365
    %v367 = vand.u32 %v366, 4294901760
    %368 = vmatpush1.msra.mxu0 %v367
    %369 = vmatprep.subr.mxu0 0.0
    %v370 = vand.u32 %v23, 4294901760
    %v371 = vsub.f32 %v23, %v370
    %v372 = vand.u32 %v371, 4294901760
    %373 = vmatpush1.msra.mxu0 %v372
    %374 = vmatprep.subr.mxu0 0.0
    %v375 = vand.u32 %v24, 4294901760
    %v376 = vsub.f32 %v24, %v375
    %v377 = vand.u32 %v376, 4294901760
    %378 = vmatpush1.msra.mxu0 %v377
    %379 = vmatprep.subr.mxu0 0.0
    %v380 = vand.u32 %v25, 4294901760
    %v381 = vsub.f32 %v25, %v380
    %v382 = vand.u32 %v381, 4294901760
    %383 = vmatpush1.msra.mxu0 %v382
    %384 = vmatprep.subr.mxu0 0.0
    %385 = vmatpush1.msra.mxu0 0.0
    %386 = vmatprep.subr.mxu0 0.0
    %387 = vmatpush1.msra.mxu0 0.0
    %388 = vmatprep.subr.mxu0 0.0
    %389 = vmatpush1.msra.mxu0 0.0
    %390 = vmatprep.subr.mxu0 0.0
    %391 = vmatpush1.msra.mxu0 0.0
    %392 = vmatprep.subr.mxu0 0.0
    %393 = vmatpush1.msra.mxu0 0.0
    %394 = vmatprep.subr.mxu0 0.0
    %395 = vmatpush1.msra.mxu0 0.0
    %396 = vmatprep.subr.mxu0 0.0
    %397 = vmatpush1.msra.mxu0 0.0
    %398 = vmatprep.subr.mxu0 0.0
    %399 = vmatpush1.msra.mxu0 0.0
    %400 = vmatprep.subr.mxu0 0.0
    %401 = vmatpush1.msra.mxu0 0.0
    %402 = vmatprep.subr.mxu0 0.0
    %403 = vmatpush1.msra.mxu0 0.0
    %404 = vmatprep.subr.mxu0 0.0
    %405 = vmatpush1.msra.mxu0 0.0
    %406 = vmatprep.subr.mxu0 0.0
    %407 = vmatpush1.msra.mxu0 0.0
    %408 = vmatprep.subr.mxu0 0.0
    %409 = vmatpush1.msra.mxu0 0.0
    %410 = vmatprep.subr.mxu0 0.0
    %411 = vmatpush1.msra.mxu0 0.0
    %412 = vmatprep.subr.mxu0 0.0
    %413 = vmatpush1.msra.mxu0 0.0
    %414 = vmatprep.subr.mxu0 0.0
    %415 = vmatpush1.msra.mxu0 0.0
    %416 = vmatprep.subr.mxu0 0.0
    %417 = vmatpush1.msra.mxu0 0.0
    %418 = vmatprep.subr.mxu0 0.0
    %419 = vmatpush1.msra.mxu0 0.0
    %420 = vmatprep.subr.mxu0 0.0
    %421 = vmatpush1.msra.mxu0 0.0
    %422 = vmatprep.subr.mxu0 0.0
    %423 = vmatpush1.msra.mxu0 0.0
    %424 = vmatprep.subr.mxu0 0.0
    %425 = vmatpush1.msra.mxu0 0.0
    %426 = vmatprep.subr.mxu0 0.0
    %427 = vmatpush1.msra.mxu0 0.0
    %428 = vmatprep.subr.mxu0 0.0
    %429 = vmatpush1.msra.mxu0 0.0
    %430 = vmatprep.subr.mxu0 0.0
    %431 = vmatpush1.msra.mxu0 0.0
    %432 = vmatprep.subr.mxu0 0.0
    %433 = vmatpush1.msra.mxu0 0.0
    %434 = vmatprep.subr.mxu0 0.0
    %435 = vmatpush1.msra.mxu0 0.0
    %436 = vmatprep.subr.mxu0 0.0
    %437 = vmatpush1.msra.mxu0 0.0
    %438 = vmatprep.subr.mxu0 0.0
    %439 = vmatpush1.msra.mxu0 0.0
    %440 = vmatprep.mubr.f32.mxu0 0.0
    %v441 = vand.u32 %v35, 4294901760
    %442 = vmatmul.mubr.f32.gmra.mrb[0].mxu0 %v441
    %v443 = vpop.f32.mrb[0].mxu0
    %v444 = vadd.f32 %v361, %v443
    %v445 = vpop.f32.mrb[0].mxu0
    %446 = vdwg.mxu0
    %447 = vmatprep.subr.mxu0 0.0
    %v448 = vand.u32 %v22, 4294901760
    %449 = vmatpush1.msra.mxu0 %v448
    %450 = vmatprep.subr.mxu0 0.0
    %v451 = vand.u32 %v23, 4294901760
    %452 = vmatpush1.msra.mxu0 %v451
    %453 = vmatprep.subr.mxu0 0.0
    %v454 = vand.u32 %v24, 4294901760
    %455 = vmatpush1.msra.mxu0 %v454
    %456 = vmatprep.subr.mxu0 0.0
    %v457 = vand.u32 %v25, 4294901760
    %458 = vmatpush1.msra.mxu0 %v457
    %459 = vmatprep.subr.mxu0 0.0
    %460 = vmatpush1.msra.mxu0 0.0
    %461 = vmatprep.subr.mxu0 0.0
    %462 = vmatpush1.msra.mxu0 0.0
    %463 = vmatprep.subr.mxu0 0.0
    %464 = vmatpush1.msra.mxu0 0.0
    %465 = vmatprep.subr.mxu0 0.0
    %466 = vmatpush1.msra.mxu0 0.0
    %467 = vmatprep.subr.mxu0 0.0
    %468 = vmatpush1.msra.mxu0 0.0
    %469 = vmatprep.subr.mxu0 0.0
    %470 = vmatpush1.msra.mxu0 0.0
    %471 = vmatprep.subr.mxu0 0.0
    %472 = vmatpush1.msra.mxu0 0.0
    %473 = vmatprep.subr.mxu0 0.0
    %474 = vmatpush1.msra.mxu0 0.0
    %475 = vmatprep.subr.mxu0 0.0
    %476 = vmatpush1.msra.mxu0 0.0
    %477 = vmatprep.subr.mxu0 0.0
    %478 = vmatpush1.msra.mxu0 0.0
    %479 = vmatprep.subr.mxu0 0.0
    %480 = vmatpush1.msra.mxu0 0.0
    %481 = vmatprep.subr.mxu0 0.0
    %482 = vmatpush1.msra.mxu0 0.0
    %483 = vmatprep.subr.mxu0 0.0
    %484 = vmatpush1.msra.mxu0 0.0
    %485 = vmatprep.subr.mxu0 0.0
    %486 = vmatpush1.msra.mxu0 0.0
    %487 = vmatprep.subr.mxu0 0.0
    %488 = vmatpush1.msra.mxu0 0.0
    %489 = vmatprep.subr.mxu0 0.0
    %490 = vmatpush1.msra.mxu0 0.0
    %491 = vmatprep.subr.mxu0 0.0
    %492 = vmatpush1.msra.mxu0 0.0
    %493 = vmatprep.subr.mxu0 0.0
    %494 = vmatpush1.msra.mxu0 0.0
    %495 = vmatprep.subr.mxu0 0.0
    %496 = vmatpush1.msra.mxu0 0.0
    %497 = vmatprep.subr.mxu0 0.0
    %498 = vmatpush1.msra.mxu0 0.0
    %499 = vmatprep.subr.mxu0 0.0
    %500 = vmatpush1.msra.mxu0 0.0
    %501 = vmatprep.subr.mxu0 0.0
    %502 = vmatpush1.msra.mxu0 0.0
    %503 = vmatprep.subr.mxu0 0.0
    %504 = vmatpush1.msra.mxu0 0.0
    %505 = vmatprep.subr.mxu0 0.0
    %506 = vmatpush1.msra.mxu0 0.0
    %507 = vmatprep.subr.mxu0 0.0
    %508 = vmatpush1.msra.mxu0 0.0
    %509 = vmatprep.subr.mxu0 0.0
    %510 = vmatpush1.msra.mxu0 0.0
    %511 = vmatprep.subr.mxu0 0.0
    %512 = vmatpush1.msra.mxu0 0.0
    %513 = vmatprep.subr.mxu0 0.0
    %514 = vmatpush1.msra.mxu0 0.0
    %515 = vmatprep.mubr.f32.mxu0 0.0
    %v516 = vand.u32 %v35, 4294901760
    %517 = vmatmul.mubr.f32.gmra.mrb[0].mxu0 %v516
    %v518 = vpop.f32.mrb[0].mxu0
    %v519 = vadd.f32 %v444, %v518
    %v520 = vpop.f32.mrb[0].mxu0
    %521 = vdwg.mxu0
    %v522 = vmax.f32 %v519, 0.0
    %v523 = vld [vmem:[%s3] sm:$0xff]
    %v524 = vld [vmem:[%s3 + $0x8] sm:$0xff]
    %v525 = vld [vmem:[%s3 + $0x10] sm:$0xff]
    %v526 = vld [vmem:[%s3 + $0x18] sm:$0xff]
    %v527 = vld [vmem:[%s3 + $0x20] sm:$0xff]
    %v528 = vld [vmem:[%s3 + $0x28] sm:$0xff]
    %v529 = vld [vmem:[%s3 + $0x30] sm:$0xff]
    %v530 = vld [vmem:[%s3 + $0x38] sm:$0xff]
    %v531 = vld [vmem:[%s3 + $0x40] sm:$0xff]
    %v532 = vld [vmem:[%s3 + $0x48] sm:$0xff]
    %v533 = vld [vmem:[%s3 + $0x50] sm:$0xff]
    %v534 = vld [vmem:[%s3 + $0x58] sm:$0xff]
    %v535 = vld [vmem:[%s3 + $0x60] sm:$0xff]
    %v536 = vld [vmem:[%s3 + $0x68] sm:$0xff]
    %v537 = vld [vmem:[%s3 + $0x70] sm:$0xff]
    %v538 = vld [vmem:[%s3 + $0x78] sm:$0xff]
    %v539 = vld [vmem:[%s4] sm:$0x1]
    %v541 = vlaneseq
    %v542 = vshrl.u32 %v541, 7
    %v543 = vsub.s32 0, %v542
    %v544 = vrot.slane %v539, %v543
    %546 = vmatprep.subr.mxu0 0.0
    %v547 = vand.u32 %v523, 4294901760
    %548 = vmatpush1.msra.mxu0 %v547
    %549 = vmatprep.subr.mxu0 0.0
    %v550 = vand.u32 %v524, 4294901760
    %551 = vmatpush1.msra.mxu0 %v550
    %552 = vmatprep.subr.mxu0 0.0
    %v553 = vand.u32 %v525, 4294901760
    %554 = vmatpush1.msra.mxu0 %v553
    %555 = vmatprep.subr.mxu0 0.0
    %v556 = vand.u32 %v526, 4294901760
    %557 = vmatpush1.msra.mxu0 %v556
    %558 = vmatprep.subr.mxu0 0.0
    %v559 = vand.u32 %v527, 4294901760
    %560 = vmatpush1.msra.mxu0 %v559
    %561 = vmatprep.subr.mxu0 0.0
    %v562 = vand.u32 %v528, 4294901760
    %563 = vmatpush1.msra.mxu0 %v562
    %564 = vmatprep.subr.mxu0 0.0
    %v565 = vand.u32 %v529, 4294901760
    %566 = vmatpush1.msra.mxu0 %v565
    %567 = vmatprep.subr.mxu0 0.0
    %v568 = vand.u32 %v530, 4294901760
    %569 = vmatpush1.msra.mxu0 %v568
    %570 = vmatprep.subr.mxu0 0.0
    %v571 = vand.u32 %v531, 4294901760
    %572 = vmatpush1.msra.mxu0 %v571
    %573 = vmatprep.subr.mxu0 0.0
    %v574 = vand.u32 %v532, 4294901760
    %575 = vmatpush1.msra.mxu0 %v574
    %576 = vmatprep.subr.mxu0 0.0
    %v577 = vand.u32 %v533, 4294901760
    %578 = vmatpush1.msra.mxu0 %v577
    %579 = vmatprep.subr.mxu0 0.0
    %v580 = vand.u32 %v534, 4294901760
    %581 = vmatpush1.msra.mxu0 %v580
    %582 = vmatprep.subr.mxu0 0.0
    %v583 = vand.u32 %v535, 4294901760
    %584 = vmatpush1.msra.mxu0 %v583
    %585 = vmatprep.subr.mxu0 0.0
    %v586 = vand.u32 %v536, 4294901760
    %587 = vmatpush1.msra.mxu0 %v586
    %588 = vmatprep.subr.mxu0 0.0
    %v589 = vand.u32 %v537, 4294901760
    %590 = vmatpush1.msra.mxu0 %v589
    %591 = vmatprep.subr.mxu0 0.0
    %v592 = vand.u32 %v538, 4294901760
    %593 = vmatpush1.msra.mxu0 %v592
    %594 = vmatprep.subr.mxu0 0.0
    %595 = vmatpush1.msra.mxu0 0.0
    %596 = vmatprep.subr.mxu0 0.0
    %597 = vmatpush1.msra.mxu0 0.0
    %598 = vmatprep.subr.mxu0 0.0
    %599 = vmatpush1.msra.mxu0 0.0
    %600 = vmatprep.subr.mxu0 0.0
    %601 = vmatpush1.msra.mxu0 0.0
    %602 = vmatprep.subr.mxu0 0.0
    %603 = vmatpush1.msra.mxu0 0.0
    %604 = vmatprep.subr.mxu0 0.0
    %605 = vmatpush1.msra.mxu0 0.0
    %606 = vmatprep.subr.mxu0 0.0
    %607 = vmatpush1.msra.mxu0 0.0
    %608 = vmatprep.subr.mxu0 0.0
    %609 = vmatpush1.msra.mxu0 0.0
    %610 = vmatprep.subr.mxu0 0.0
    %611 = vmatpush1.msra.mxu0 0.0
    %612 = vmatprep.subr.mxu0 0.0
    %613 = vmatpush1.msra.mxu0 0.0
    %614 = vmatprep.subr.mxu0 0.0
    %615 = vmatpush1.msra.mxu0 0.0
    %616 = vmatprep.subr.mxu0 0.0
    %617 = vmatpush1.msra.mxu0 0.0
    %618 = vmatprep.subr.mxu0 0.0
    %619 = vmatpush1.msra.mxu0 0.0
    %620 = vmatprep.subr.mxu0 0.0
    %621 = vmatpush1.msra.mxu0 0.0
    %622 = vmatprep.subr.mxu0 0.0
    %623 = vmatpush1.msra.mxu0 0.0
    %624 = vmatprep.subr.mxu0 0.0
    %625 = vmatpush1.msra.mxu0 0.0
    %626 = vmatprep.mubr.f32.mxu0 0.0
    %v627 = vand.u32 %v522, 4294901760
    %v628 = vsub.f32 %v522, %v627
    %v629 = vand.u32 %v628, 4294901760
    %v630 = vsub.f32 %v628, %v629
    %v631 = vand.u32 %v630, 4294901760
    %632 = vmatmul.mubr.f32.gmra.mrb[0].mxu0 %v631
    %v633 = vpop.f32.mrb[0].mxu0
    %v634 = vadd.f32 %v544, %v633
    %v635 = vpop.f32.mrb[0].mxu0
    %636 = vdwg.mxu0
    %637 = vmatprep.subr.mxu0 0.0
    %v638 = vand.u32 %v523, 4294901760
    %v639 = vsub.f32 %v523, %v638
    %v640 = vand.u32 %v639, 4294901760
    %v641 = vsub.f32 %v639, %v640
    %v642 = vand.u32 %v641, 4294901760
    %643 = vmatpush1.msra.mxu0 %v642
    %644 = vmatprep.subr.mxu0 0.0
    %v645 = vand.u32 %v524, 4294901760
    %v646 = vsub.f32 %v524, %v645
    %v647 = vand.u32 %v646, 4294901760
    %v648 = vsub.f32 %v646, %v647
    %v649 = vand.u32 %v648, 4294901760
    %650 = vmatpush1.msra.mxu0 %v649
    %651 = vmatprep.subr.mxu0 0.0
    %v652 = vand.u32 %v525, 4294901760
    %v653 = vsub.f32 %v525, %v652
    %v654 = vand.u32 %v653, 4294901760
    %v655 = vsub.f32 %v653, %v654
    %v656 = vand.u32 %v655, 4294901760
    %657 = vmatpush1.msra.mxu0 %v656
    %658 = vmatprep.subr.mxu0 0.0
    %v659 = vand.u32 %v526, 4294901760
    %v660 = vsub.f32 %v526, %v659
    %v661 = vand.u32 %v660, 4294901760
    %v662 = vsub.f32 %v660, %v661
    %v663 = vand.u32 %v662, 4294901760
    %664 = vmatpush1.msra.mxu0 %v663
    %665 = vmatprep.subr.mxu0 0.0
    %v666 = vand.u32 %v527, 4294901760
    %v667 = vsub.f32 %v527, %v666
    %v668 = vand.u32 %v667, 4294901760
    %v669 = vsub.f32 %v667, %v668
    %v670 = vand.u32 %v669, 4294901760
    %671 = vmatpush1.msra.mxu0 %v670
    %672 = vmatprep.subr.mxu0 0.0
    %v673 = vand.u32 %v528, 4294901760
    %v674 = vsub.f32 %v528, %v673
    %v675 = vand.u32 %v674, 4294901760
    %v676 = vsub.f32 %v674, %v675
    %v677 = vand.u32 %v676, 4294901760
    %678 = vmatpush1.msra.mxu0 %v677
    %679 = vmatprep.subr.mxu0 0.0
    %v680 = vand.u32 %v529, 4294901760
    %v681 = vsub.f32 %v529, %v680
    %v682 = vand.u32 %v681, 4294901760
    %v683 = vsub.f32 %v681, %v682
    %v684 = vand.u32 %v683, 4294901760
    %685 = vmatpush1.msra.mxu0 %v684
    %686 = vmatprep.subr.mxu0 0.0
    %v687 = vand.u32 %v530, 4294901760
    %v688 = vsub.f32 %v530, %v687
    %v689 = vand.u32 %v688, 4294901760
    %v690 = vsub.f32 %v688, %v689
    %v691 = vand.u32 %v690, 4294901760
    %692 = vmatpush1.msra.mxu0 %v691
    %693 = vmatprep.subr.mxu0 0.0
    %v694 = vand.u32 %v531, 4294901760
    %v695 = vsub.f32 %v531, %v694
    %v696 = vand.u32 %v695, 4294901760
    %v697 = vsub.f32 %v695, %v696
    %v698 = vand.u32 %v697, 4294901760
    %699 = vmatpush1.msra.mxu0 %v698
    %700 = vmatprep.subr.mxu0 0.0
    %v701 = vand.u32 %v532, 4294901760
    %v702 = vsub.f32 %v532, %v701
    %v703 = vand.u32 %v702, 4294901760
    %v704 = vsub.f32 %v702, %v703
    %v705 = vand.u32 %v704, 4294901760
    %706 = vmatpush1.msra.mxu0 %v705
    %707 = vmatprep.subr.mxu0 0.0
    %v708 = vand.u32 %v533, 4294901760
    %v709 = vsub.f32 %v533, %v708
    %v710 = vand.u32 %v709, 4294901760
    %v711 = vsub.f32 %v709, %v710
    %v712 = vand.u32 %v711, 4294901760
    %713 = vmatpush1.msra.mxu0 %v712
    %714 = vmatprep.subr.mxu0 0.0
    %v715 = vand.u32 %v534, 4294901760
    %v716 = vsub.f32 %v534, %v715
    %v717 = vand.u32 %v716, 4294901760
    %v718 = vsub.f32 %v716, %v717
    %v719 = vand.u32 %v718, 4294901760
    %720 = vmatpush1.msra.mxu0 %v719
    %721 = vmatprep.subr.mxu0 0.0
    %v722 = vand.u32 %v535, 4294901760
    %v723 = vsub.f32 %v535, %v722
    %v724 = vand.u32 %v723, 4294901760
    %v725 = vsub.f32 %v723, %v724
    %v726 = vand.u32 %v725, 4294901760
    %727 = vmatpush1.msra.mxu0 %v726
    %728 = vmatprep.subr.mxu0 0.0
    %v729 = vand.u32 %v536, 4294901760
    %v730 = vsub.f32 %v536, %v729
    %v731 = vand.u32 %v730, 4294901760
    %v732 = vsub.f32 %v730, %v731
    %v733 = vand.u32 %v732, 4294901760
    %734 = vmatpush1.msra.mxu0 %v733
    %735 = vmatprep.subr.mxu0 0.0
    %v736 = vand.u32 %v537, 4294901760
    %v737 = vsub.f32 %v537, %v736
    %v738 = vand.u32 %v737, 4294901760
    %v739 = vsub.f32 %v737, %v738
    %v740 = vand.u32 %v739, 4294901760
    %741 = vmatpush1.msra.mxu0 %v740
    %742 = vmatprep.subr.mxu0 0.0
    %v743 = vand.u32 %v538, 4294901760
    %v744 = vsub.f32 %v538, %v743
    %v745 = vand.u32 %v744, 4294901760
    %v746 = vsub.f32 %v744, %v745
    %v747 = vand.u32 %v746, 4294901760
    %748 = vmatpush1.msra.mxu0 %v747
    %749 = vmatprep.subr.mxu0 0.0
    %750 = vmatpush1.msra.mxu0 0.0
    %751 = vmatprep.subr.mxu0 0.0
    %752 = vmatpush1.msra.mxu0 0.0
    %753 = vmatprep.subr.mxu0 0.0
    %754 = vmatpush1.msra.mxu0 0.0
    %755 = vmatprep.subr.mxu0 0.0
    %756 = vmatpush1.msra.mxu0 0.0
    %757 = vmatprep.subr.mxu0 0.0
    %758 = vmatpush1.msra.mxu0 0.0
    %759 = vmatprep.subr.mxu0 0.0
    %760 = vmatpush1.msra.mxu0 0.0
    %761 = vmatprep.subr.mxu0 0.0
    %762 = vmatpush1.msra.mxu0 0.0
    %763 = vmatprep.subr.mxu0 0.0
    %764 = vmatpush1.msra.mxu0 0.0
    %765 = vmatprep.subr.mxu0 0.0
    %766 = vmatpush1.msra.mxu0 0.0
    %767 = vmatprep.subr.mxu0 0.0
    %768 = vmatpush1.msra.mxu0 0.0
    %769 = vmatprep.subr.mxu0 0.0
    %770 = vmatpush1.msra.mxu0 0.0
    %771 = vmatprep.subr.mxu0 0.0
    %772 = vmatpush1.msra.mxu0 0.0
    %773 = vmatprep.subr.mxu0 0.0
    %774 = vmatpush1.msra.mxu0 0.0
    %775 = vmatprep.subr.mxu0 0.0
    %776 = vmatpush1.msra.mxu0 0.0
    %777 = vmatprep.subr.mxu0 0.0
    %778 = vmatpush1.msra.mxu0 0.0
    %779 = vmatprep.subr.mxu0 0.0
    %780 = vmatpush1.msra.mxu0 0.0
    %781 = vmatprep.mubr.f32.mxu0 0.0
    %v782 = vand.u32 %v522, 4294901760
    %783 = vmatmul.mubr.f32.gmra.mrb[0].mxu0 %v782
    %v784 = vpop.f32.mrb[0].mxu0
    %v785 = vadd.f32 %v634, %v784
    %v786 = vpop.f32.mrb[0].mxu0
    %787 = vdwg.mxu0
    %788 = vmatprep.subr.mxu0 0.0
    %v789 = vand.u32 %v523, 4294901760
    %v790 = vsub.f32 %v523, %v789
    %791 = vmatpush1.msra.mxu0 %v790
    %792 = vmatprep.subr.mxu0 0.0
    %v793 = vand.u32 %v524, 4294901760
    %v794 = vsub.f32 %v524, %v793
    %795 = vmatpush1.msra.mxu0 %v794
    %796 = vmatprep.subr.mxu0 0.0
    %v797 = vand.u32 %v525, 4294901760
    %v798 = vsub.f32 %v525, %v797
    %799 = vmatpush1.msra.mxu0 %v798
    %800 = vmatprep.subr.mxu0 0.0
    %v801 = vand.u32 %v526, 4294901760
    %v802 = vsub.f32 %v526, %v801
    %803 = vmatpush1.msra.mxu0 %v802
    %804 = vmatprep.subr.mxu0 0.0
    %v805 = vand.u32 %v527, 4294901760
    %v806 = vsub.f32 %v527, %v805
    %807 = vmatpush1.msra.mxu0 %v806
    %808 = vmatprep.subr.mxu0 0.0
    %v809 = vand.u32 %v528, 4294901760
    %v810 = vsub.f32 %v528, %v809
    %811 = vmatpush1.msra.mxu0 %v810
    %812 = vmatprep.subr.mxu0 0.0
    %v813 = vand.u32 %v529, 4294901760
    %v814 = vsub.f32 %v529, %v813
    %815 = vmatpush1.msra.mxu0 %v814
    %816 = vmatprep.subr.mxu0 0.0
    %v817 = vand.u32 %v530, 4294901760
    %v818 = vsub.f32 %v530, %v817
    %819 = vmatpush1.msra.mxu0 %v818
    %820 = vmatprep.subr.mxu0 0.0
    %v821 = vand.u32 %v531, 4294901760
    %v822 = vsub.f32 %v531, %v821
    %823 = vmatpush1.msra.mxu0 %v822
    %824 = vmatprep.subr.mxu0 0.0
    %v825 = vand.u32 %v532, 4294901760
    %v826 = vsub.f32 %v532, %v825
    %827 = vmatpush1.msra.mxu0 %v826
    %828 = vmatprep.subr.mxu0 0.0
    %v829 = vand.u32 %v533, 4294901760
    %v830 = vsub.f32 %v533, %v829
    %831 = vmatpush1.msra.mxu0 %v830
    %832 = vmatprep.subr.mxu0 0.0
    %v833 = vand.u32 %v534, 4294901760
    %v834 = vsub.f32 %v534, %v833
    %835 = vmatpush1.msra.mxu0 %v834
    %836 = vmatprep.subr.mxu0 0.0
    %v837 = vand.u32 %v535, 4294901760
    %v838 = vsub.f32 %v535, %v837
    %839 = vmatpush1.msra.mxu0 %v838
    %840 = vmatprep.subr.mxu0 0.0
    %v841 = vand.u32 %v536, 4294901760
    %v842 = vsub.f32 %v536, %v841
    %843 = vmatpush1.msra.mxu0 %v842
    %844 = vmatprep.subr.mxu0 0.0
    %v845 = vand.u32 %v537, 4294901760
    %v846 = vsub.f32 %v537, %v845
    %847 = vmatpush1.msra.mxu0 %v846
    %848 = vmatprep.subr.mxu0 0.0
    %v849 = vand.u32 %v538, 4294901760
    %v850 = vsub.f32 %v538, %v849
    %851 = vmatpush1.msra.mxu0 %v850
    %852 = vmatprep.subr.mxu0 0.0
    %853 = vmatpush1.msra.mxu0 0.0
    %854 = vmatprep.subr.mxu0 0.0
    %855 = vmatpush1.msra.mxu0 0.0
    %856 = vmatprep.subr.mxu0 0.0
    %857 = vmatpush1.msra.mxu0 0.0
    %858 = vmatprep.subr.mxu0 0.0
    %859 = vmatpush1.msra.mxu0 0.0
    %860 = vmatprep.subr.mxu0 0.0
    %861 = vmatpush1.msra.mxu0 0.0
    %862 = vmatprep.subr.mxu0 0.0
    %863 = vmatpush1.msra.mxu0 0.0
    %864 = vmatprep.subr.mxu0 0.0
    %865 = vmatpush1.msra.mxu0 0.0
    %866 = vmatprep.subr.mxu0 0.0
    %867 = vmatpush1.msra.mxu0 0.0
    %868 = vmatprep.subr.mxu0 0.0
    %869 = vmatpush1.msra.mxu0 0.0
    %870 = vmatprep.subr.mxu0 0.0
    %871 = vmatpush1.msra.mxu0 0.0
    %872 = vmatprep.subr.mxu0 0.0
    %873 = vmatpush1.msra.mxu0 0.0
    %874 = vmatprep.subr.mxu0 0.0
    %875 = vmatpush1.msra.mxu0 0.0
    %876 = vmatprep.subr.mxu0 0.0
    %877 = vmatpush1.msra.mxu0 0.0
    %878 = vmatprep.subr.mxu0 0.0
    %879 = vmatpush1.msra.mxu0 0.0
    %880 = vmatprep.subr.mxu0 0.0
    %881 = vmatpush1.msra.mxu0 0.0
    %882 = vmatprep.subr.mxu0 0.0
    %883 = vmatpush1.msra.mxu0 0.0
    %884 = vmatprep.mubr.f32.mxu0 0.0
    %v885 = vand.u32 %v522, 4294901760
    %v886 = vsub.f32 %v522, %v885
    %887 = vmatmul.mubr.f32.gmra.mrb[0].mxu0 %v886
    %v888 = vpop.f32.mrb[0].mxu0
    %v889 = vadd.f32 %v785, %v888
    %v890 = vpop.f32.mrb[0].mxu0
    %891 = vdwg.mxu0
    %892 = vmatprep.subr.mxu0 0.0
    %v893 = vand.u32 %v523, 4294901760
    %894 = vmatpush1.msra.mxu0 %v893
    %895 = vmatprep.subr.mxu0 0.0
    %v896 = vand.u32 %v524, 4294901760
    %897 = vmatpush1.msra.mxu0 %v896
    %898 = vmatprep.subr.mxu0 0.0
    %v899 = vand.u32 %v525, 4294901760
    %900 = vmatpush1.msra.mxu0 %v899
    %901 = vmatprep.subr.mxu0 0.0
    %v902 = vand.u32 %v526, 4294901760
    %903 = vmatpush1.msra.mxu0 %v902
    %904 = vmatprep.subr.mxu0 0.0
    %v905 = vand.u32 %v527, 4294901760
    %906 = vmatpush1.msra.mxu0 %v905
    %907 = vmatprep.subr.mxu0 0.0
    %v908 = vand.u32 %v528, 4294901760
    %909 = vmatpush1.msra.mxu0 %v908
    %910 = vmatprep.subr.mxu0 0.0
    %v911 = vand.u32 %v529, 4294901760
    %912 = vmatpush1.msra.mxu0 %v911
    %913 = vmatprep.subr.mxu0 0.0
    %v914 = vand.u32 %v530, 4294901760
    %915 = vmatpush1.msra.mxu0 %v914
    %916 = vmatprep.subr.mxu0 0.0
    %v917 = vand.u32 %v531, 4294901760
    %918 = vmatpush1.msra.mxu0 %v917
    %919 = vmatprep.subr.mxu0 0.0
    %v920 = vand.u32 %v532, 4294901760
    %921 = vmatpush1.msra.mxu0 %v920
    %922 = vmatprep.subr.mxu0 0.0
    %v923 = vand.u32 %v533, 4294901760
    %924 = vmatpush1.msra.mxu0 %v923
    %925 = vmatprep.subr.mxu0 0.0
    %v926 = vand.u32 %v534, 4294901760
    %927 = vmatpush1.msra.mxu0 %v926
    %928 = vmatprep.subr.mxu0 0.0
    %v929 = vand.u32 %v535, 4294901760
    %930 = vmatpush1.msra.mxu0 %v929
    %931 = vmatprep.subr.mxu0 0.0
    %v932 = vand.u32 %v536, 4294901760
    %933 = vmatpush1.msra.mxu0 %v932
    %934 = vmatprep.subr.mxu0 0.0
    %v935 = vand.u32 %v537, 4294901760
    %936 = vmatpush1.msra.mxu0 %v935
    %937 = vmatprep.subr.mxu0 0.0
    %v938 = vand.u32 %v538, 4294901760
    %939 = vmatpush1.msra.mxu0 %v938
    %940 = vmatprep.subr.mxu0 0.0
    %941 = vmatpush1.msra.mxu0 0.0
    %942 = vmatprep.subr.mxu0 0.0
    %943 = vmatpush1.msra.mxu0 0.0
    %944 = vmatprep.subr.mxu0 0.0
    %945 = vmatpush1.msra.mxu0 0.0
    %946 = vmatprep.subr.mxu0 0.0
    %947 = vmatpush1.msra.mxu0 0.0
    %948 = vmatprep.subr.mxu0 0.0
    %949 = vmatpush1.msra.mxu0 0.0
    %950 = vmatprep.subr.mxu0 0.0
    %951 = vmatpush1.msra.mxu0 0.0
    %952 = vmatprep.subr.mxu0 0.0
    %953 = vmatpush1.msra.mxu0 0.0
    %954 = vmatprep.subr.mxu0 0.0
    %955 = vmatpush1.msra.mxu0 0.0
    %956 = vmatprep.subr.mxu0 0.0
    %957 = vmatpush1.msra.mxu0 0.0
    %958 = vmatprep.subr.mxu0 0.0
    %959 = vmatpush1.msra.mxu0 0.0
    %960 = vmatprep.subr.mxu0 0.0
    %961 = vmatpush1.msra.mxu0 0.0
    %962 = vmatprep.subr.mxu0 0.0
    %963 = vmatpush1.msra.mxu0 0.0
    %964 = vmatprep.subr.mxu0 0.0
    %965 = vmatpush1.msra.mxu0 0.0
    %966 = vmatprep.subr.mxu0 0.0
    %967 = vmatpush1.msra.mxu0 0.0
    %968 = vmatprep.subr.mxu0 0.0
    %969 = vmatpush1.msra.mxu0 0.0
    %970 = vmatprep.subr.mxu0 0.0
    %971 = vmatpush1.msra.mxu0 0.0
    %972 = vmatprep.mubr.f32.mxu0 0.0
    %v973 = vand.u32 %v522, 4294901760
    %v974 = vsub.f32 %v522, %v973
    %v975 = vand.u32 %v974, 4294901760
    %976 = vmatmul.mubr.f32.gmra.mrb[0].mxu0 %v975
    %v977 = vpop.f32.mrb[0].mxu0
    %v978 = vadd.f32 %v889, %v977
    %v979 = vpop.f32.mrb[0].mxu0
    %980 = vdwg.mxu0
    %981 = vmatprep.subr.mxu0 0.0
    %v982 = vand.u32 %v523, 4294901760
    %v983 = vsub.f32 %v523, %v982
    %v984 = vand.u32 %v983, 4294901760
    %985 = vmatpush1.msra.mxu0 %v984
    %986 = vmatprep.subr.mxu0 0.0
    %v987 = vand.u32 %v524, 4294901760
    %v988 = vsub.f32 %v524, %v987
    %v989 = vand.u32 %v988, 4294901760
    %990 = vmatpush1.msra.mxu0 %v989
    %991 = vmatprep.subr.mxu0 0.0
    %v992 = vand.u32 %v525, 4294901760
    %v993 = vsub.f32 %v525, %v992
    %v994 = vand.u32 %v993, 4294901760
    %995 = vmatpush1.msra.mxu0 %v994
    %996 = vmatprep.subr.mxu0 0.0
    %v997 = vand.u32 %v526, 4294901760
    %v998 = vsub.f32 %v526, %v997
    %v999 = vand.u32 %v998, 4294901760
    %1000 = vmatpush1.msra.mxu0 %v999
    %1001 = vmatprep.subr.mxu0 0.0
    %v1002 = vand.u32 %v527, 4294901760
    %v1003 = vsub.f32 %v527, %v1002
    %v1004 = vand.u32 %v1003, 4294901760
    %1005 = vmatpush1.msra.mxu0 %v1004
    %1006 = vmatprep.subr.mxu0 0.0
    %v1007 = vand.u32 %v528, 4294901760
    %v1008 = vsub.f32 %v528, %v1007
    %v1009 = vand.u32 %v1008, 4294901760
    %1010 = vmatpush1.msra.mxu0 %v1009
    %1011 = vmatprep.subr.mxu0 0.0
    %v1012 = vand.u32 %v529, 4294901760
    %v1013 = vsub.f32 %v529, %v1012
    %v1014 = vand.u32 %v1013, 4294901760
    %1015 = vmatpush1.msra.mxu0 %v1014
    %1016 = vmatprep.subr.mxu0 0.0
    %v1017 = vand.u32 %v530, 4294901760
    %v1018 = vsub.f32 %v530, %v1017
    %v1019 = vand.u32 %v1018, 4294901760
    %1020 = vmatpush1.msra.mxu0 %v1019
    %1021 = vmatprep.subr.mxu0 0.0
    %v1022 = vand.u32 %v531, 4294901760
    %v1023 = vsub.f32 %v531, %v1022
    %v1024 = vand.u32 %v1023, 4294901760
    %1025 = vmatpush1.msra.mxu0 %v1024
    %1026 = vmatprep.subr.mxu0 0.0
    %v1027 = vand.u32 %v532, 4294901760
    %v1028 = vsub.f32 %v532, %v1027
    %v1029 = vand.u32 %v1028, 4294901760
    %1030 = vmatpush1.msra.mxu0 %v1029
    %1031 = vmatprep.subr.mxu0 0.0
    %v1032 = vand.u32 %v533, 4294901760
    %v1033 = vsub.f32 %v533, %v1032
    %v1034 = vand.u32 %v1033, 4294901760
    %1035 = vmatpush1.msra.mxu0 %v1034
    %1036 = vmatprep.subr.mxu0 0.0
    %v1037 = vand.u32 %v534, 4294901760
    %v1038 = vsub.f32 %v534, %v1037
    %v1039 = vand.u32 %v1038, 4294901760
    %1040 = vmatpush1.msra.mxu0 %v1039
    %1041 = vmatprep.subr.mxu0 0.0
    %v1042 = vand.u32 %v535, 4294901760
    %v1043 = vsub.f32 %v535, %v1042
    %v1044 = vand.u32 %v1043, 4294901760
    %1045 = vmatpush1.msra.mxu0 %v1044
    %1046 = vmatprep.subr.mxu0 0.0
    %v1047 = vand.u32 %v536, 4294901760
    %v1048 = vsub.f32 %v536, %v1047
    %v1049 = vand.u32 %v1048, 4294901760
    %1050 = vmatpush1.msra.mxu0 %v1049
    %1051 = vmatprep.subr.mxu0 0.0
    %v1052 = vand.u32 %v537, 4294901760
    %v1053 = vsub.f32 %v537, %v1052
    %v1054 = vand.u32 %v1053, 4294901760
    %1055 = vmatpush1.msra.mxu0 %v1054
    %1056 = vmatprep.subr.mxu0 0.0
    %v1057 = vand.u32 %v538, 4294901760
    %v1058 = vsub.f32 %v538, %v1057
    %v1059 = vand.u32 %v1058, 4294901760
    %1060 = vmatpush1.msra.mxu0 %v1059
    %1061 = vmatprep.subr.mxu0 0.0
    %1062 = vmatpush1.msra.mxu0 0.0
    %1063 = vmatprep.subr.mxu0 0.0
    %1064 = vmatpush1.msra.mxu0 0.0
    %1065 = vmatprep.subr.mxu0 0.0
    %1066 = vmatpush1.msra.mxu0 0.0
    %1067 = vmatprep.subr.mxu0 0.0
    %1068 = vmatpush1.msra.mxu0 0.0
    %1069 = vmatprep.subr.mxu0 0.0
    %1070 = vmatpush1.msra.mxu0 0.0
    %1071 = vmatprep.subr.mxu0 0.0
    %1072 = vmatpush1.msra.mxu0 0.0
    %1073 = vmatprep.subr.mxu0 0.0
    %1074 = vmatpush1.msra.mxu0 0.0
    %1075 = vmatprep.subr.mxu0 0.0
    %1076 = vmatpush1.msra.mxu0 0.0
    %1077 = vmatprep.subr.mxu0 0.0
    %1078 = vmatpush1.msra.mxu0 0.0
    %1079 = vmatprep.subr.mxu0 0.0
    %1080 = vmatpush1.msra.mxu0 0.0
    %1081 = vmatprep.subr.mxu0 0.0
    %1082 = vmatpush1.msra.mxu0 0.0
    %1083 = vmatprep.subr.mxu0 0.0
    %1084 = vmatpush1.msra.mxu0 0.0
    %1085 = vmatprep.subr.mxu0 0.0
    %1086 = vmatpush1.msra.mxu0 0.0
    %1087 = vmatprep.subr.mxu0 0.0
    %1088 = vmatpush1.msra.mxu0 0.0
    %1089 = vmatprep.subr.mxu0 0.0
    %1090 = vmatpush1.msra.mxu0 0.0
    %1091 = vmatprep.subr.mxu0 0.0
    %1092 = vmatpush1.msra.mxu0 0.0
    %1093 = vmatprep.mubr.f32.mxu0 0.0
    %v1094 = vand.u32 %v522, 4294901760
    %1095 = vmatmul.mubr.f32.gmra.mrb[0].mxu0 %v1094
    %v1096 = vpop.f32.mrb[0].mxu0
    %v1097 = vadd.f32 %v978, %v1096
    %v1098 = vpop.f32.mrb[0].mxu0
    %1099 = vdwg.mxu0
    %1100 = vmatprep.subr.mxu0 0.0
    %v1101 = vand.u32 %v523, 4294901760
    %1102 = vmatpush1.msra.mxu0 %v1101
    %1103 = vmatprep.subr.mxu0 0.0
    %v1104 = vand.u32 %v524, 4294901760
    %1105 = vmatpush1.msra.mxu0 %v1104
    %1106 = vmatprep.subr.mxu0 0.0
    %v1107 = vand.u32 %v525, 4294901760
    %1108 = vmatpush1.msra.mxu0 %v1107
    %1109 = vmatprep.subr.mxu0 0.0
    %v1110 = vand.u32 %v526, 4294901760
    %1111 = vmatpush1.msra.mxu0 %v1110
    %1112 = vmatprep.subr.mxu0 0.0
    %v1113 = vand.u32 %v527, 4294901760
    %1114 = vmatpush1.msra.mxu0 %v1113
    %1115 = vmatprep.subr.mxu0 0.0
    %v1116 = vand.u32 %v528, 4294901760
    %1117 = vmatpush1.msra.mxu0 %v1116
    %1118 = vmatprep.subr.mxu0 0.0
    %v1119 = vand.u32 %v529, 4294901760
    %1120 = vmatpush1.msra.mxu0 %v1119
    %1121 = vmatprep.subr.mxu0 0.0
    %v1122 = vand.u32 %v530, 4294901760
    %1123 = vmatpush1.msra.mxu0 %v1122
    %1124 = vmatprep.subr.mxu0 0.0
    %v1125 = vand.u32 %v531, 4294901760
    %1126 = vmatpush1.msra.mxu0 %v1125
    %1127 = vmatprep.subr.mxu0 0.0
    %v1128 = vand.u32 %v532, 4294901760
    %1129 = vmatpush1.msra.mxu0 %v1128
    %1130 = vmatprep.subr.mxu0 0.0
    %v1131 = vand.u32 %v533, 4294901760
    %1132 = vmatpush1.msra.mxu0 %v1131
    %1133 = vmatprep.subr.mxu0 0.0
    %v1134 = vand.u32 %v534, 4294901760
    %1135 = vmatpush1.msra.mxu0 %v1134
    %1136 = vmatprep.subr.mxu0 0.0
    %v1137 = vand.u32 %v535, 4294901760
    %1138 = vmatpush1.msra.mxu0 %v1137
    %1139 = vmatprep.subr.mxu0 0.0
    %v1140 = vand.u32 %v536, 4294901760
    %1141 = vmatpush1.msra.mxu0 %v1140
    %1142 = vmatprep.subr.mxu0 0.0
    %v1143 = vand.u32 %v537, 4294901760
    %1144 = vmatpush1.msra.mxu0 %v1143
    %1145 = vmatprep.subr.mxu0 0.0
    %v1146 = vand.u32 %v538, 4294901760
    %1147 = vmatpush1.msra.mxu0 %v1146
    %1148 = vmatprep.subr.mxu0 0.0
    %1149 = vmatpush1.msra.mxu0 0.0
    %1150 = vmatprep.subr.mxu0 0.0
    %1151 = vmatpush1.msra.mxu0 0.0
    %1152 = vmatprep.subr.mxu0 0.0
    %1153 = vmatpush1.msra.mxu0 0.0
    %1154 = vmatprep.subr.mxu0 0.0
    %1155 = vmatpush1.msra.mxu0 0.0
    %1156 = vmatprep.subr.mxu0 0.0
    %1157 = vmatpush1.msra.mxu0 0.0
    %1158 = vmatprep.subr.mxu0 0.0
    %1159 = vmatpush1.msra.mxu0 0.0
    %1160 = vmatprep.subr.mxu0 0.0
    %1161 = vmatpush1.msra.mxu0 0.0
    %1162 = vmatprep.subr.mxu0 0.0
    %1163 = vmatpush1.msra.mxu0 0.0
    %1164 = vmatprep.subr.mxu0 0.0
    %1165 = vmatpush1.msra.mxu0 0.0
    %1166 = vmatprep.subr.mxu0 0.0
    %1167 = vmatpush1.msra.mxu0 0.0
    %1168 = vmatprep.subr.mxu0 0.0
    %1169 = vmatpush1.msra.mxu0 0.0
    %1170 = vmatprep.subr.mxu0 0.0
    %1171 = vmatpush1.msra.mxu0 0.0
    %1172 = vmatprep.subr.mxu0 0.0
    %1173 = vmatpush1.msra.mxu0 0.0
    %1174 = vmatprep.subr.mxu0 0.0
    %1175 = vmatpush1.msra.mxu0 0.0
    %1176 = vmatprep.subr.mxu0 0.0
    %1177 = vmatpush1.msra.mxu0 0.0
    %1178 = vmatprep.subr.mxu0 0.0
    %1179 = vmatpush1.msra.mxu0 0.0
    %1180 = vmatprep.mubr.f32.mxu0 0.0
    %v1181 = vand.u32 %v522, 4294901760
    %1182 = vmatmul.mubr.f32.gmra.mrb[0].mxu0 %v1181
    %v1183 = vpop.f32.mrb[0].mxu0
    %v1184 = vadd.f32 %v1097, %v1183
    %v1185 = vpop.f32.mrb[0].mxu0
    %1186 = vdwg.mxu0
    %vm1187 = vcmask 130048
    %1188 = vst.msk [vmem:[#allocation2] sm:$0xff] %vm1187, %v1184
    // Predicated region
    $region22: #{tpu_custom_call.1} parent=1 // pred_check
      _
    $region23: #{tpu_custom_call.1} parent=1 // pred_check_branch
      %1190 = sbr.rel (0) target = $region25
    $region24: #{tpu_custom_call.1} parent=1 // pred_region
      %s1192 = ssub.s32 128, 128
      %1193 = vsyncadd [#allocation3], %s1192
      %s1195 = sshll.u32 [#allocation2], 4
      %s1196 = int_to_ptr.vmem [resolvable:$true] %s1195
      %1198 = dma.vmem_to_hbm [thread:$0]  %s1196, 128, %s5, [#allocation3]
    $region25: #{tpu_custom_call.1} parent=1 // pred_fallthru
      _
    // Predicated region
    $region26: #{tpu_custom_call.1} parent=1 // pred_check
      _
    $region27: #{tpu_custom_call.1} parent=1 // pred_check_branch
      %1200 = sbr.rel (0) target = $region29
    $region28: #{tpu_custom_call.1} parent=1 // pred_region
      %1201 = dma.done [#allocation3], 128
    $region29: #{tpu_custom_call.1} parent=1 // pred_fallthru
      _
    %1202 = vsyncpa [#allocation3], 1

// kernel: tpu_custom_call.1
$region0: #{tpu_custom_call.1}
  #allocation0 [shape = 'u32[]', space=smem, size = 0x4, offset = 0x4, fixed_abs, tag = 'smem constant byte address 0x4 - core index']
  #allocation1 [shape = 'u32[144,128]{1,0:T(1,128)}', space=vmem, size = 0x12000, scoped, tag = 'internal scratch']
  %s0 = inlined_call_operand.vmem [shape: f32[8,32], index: 0, kind: input, shape index: {}]
  %s1 = inlined_call_operand.vmem [shape: f32[32,128], index: 1, kind: input, shape index: {}]
  %s2 = inlined_call_operand.vmem [shape: f32[1,128], index: 2, kind: input, shape index: {}]
  %s3 = inlined_call_operand.vmem [shape: f32[128,16], index: 3, kind: input, shape index: {}]
  %s4 = inlined_call_operand.vmem [shape: f32[1,16], index: 4, kind: input, shape index: {}]
  %s5 = inlined_call_operand.hbm [shape: f32[8,16], index: 5, kind: output, shape index: {}]
  %s6 = sld [smem:[#allocation0]]
  $region30: #{tpu_custom_call.1} parent=0
    _
  %s8 = ssub.s32 1, %s6
  %s9 = scalar_select 0, %s8, %s6
  $region1: #{tpu_custom_call.1} parent=0
    #allocation2 [shape = 'u8[4096]{0}', space=vmem, size = 0x1000, scoped, tag = 'output window, operand 0, single buffered']
    #allocation3 [shape = 's32[1]{0}', space=sflag, size = 0x4, scoped, tag = 'scoped memory for tpu_custom_call.1']
    %10 = vsyncpa [#allocation3], 0
    // Predicated region
    $region2: #{tpu_custom_call.1} parent=1 // pred_check
      _
    $region3: #{tpu_custom_call.1} parent=1 // pred_check_branch
      %12 = sbr.rel (0) target = $region5
    $region4: #{tpu_custom_call.1} parent=1 // pred_region
      _
    $region5: #{tpu_custom_call.1} parent=1 // pred_fallthru
      _
    // Predicated region
    $region6: #{tpu_custom_call.1} parent=1 // pred_check
      _
    $region7: #{tpu_custom_call.1} parent=1 // pred_check_branch
      %14 = sbr.rel (0) target = $region9
    $region8: #{tpu_custom_call.1} parent=1 // pred_region
      _
    $region9: #{tpu_custom_call.1} parent=1 // pred_fallthru
      _
    // Predicated region
    $region10: #{tpu_custom_call.1} parent=1 // pred_check
      _
    $region11: #{tpu_custom_call.1} parent=1 // pred_check_branch
      %16 = sbr.rel (0) target = $region13
    $region12: #{tpu_custom_call.1} parent=1 // pred_region
      _
    $region13: #{tpu_custom_call.1} parent=1 // pred_fallthru
      _
    // Predicated region
    $region14: #{tpu_custom_call.1} parent=1 // pred_check
      _
    $region15: #{tpu_custom_call.1} parent=1 // pred_check_branch
      %18 = sbr.rel (0) target = $region17
    $region16: #{tpu_custom_call.1} parent=1 // pred_region
      _
    $region17: #{tpu_custom_call.1} parent=1 // pred_fallthru
      _
    // Predicated region
    $region18: #{tpu_custom_call.1} parent=1 // pred_check
      _
    $region19: #{tpu_custom_call.1} parent=1 // pred_check_branch
      %20 = sbr.rel (0) target = $region21
    $region20: #{tpu_custom_call.1} parent=1 // pred_region
      _
    $region21: #{tpu_custom_call.1} parent=1 // pred_fallthru
      _
    %v21 = vld [vmem:[%s0] sm:$0xff]
    %v22 = vld [vmem:[%s1] sm:$0xff]
    %v23 = vld [vmem:[%s1 + $0x8] sm:$0xff]
    %v24 = vld [vmem:[%s1 + $0x10] sm:$0xff]
    %v25 = vld [vmem:[%s1 + $0x18] sm:$0xff]
    %v26 = vld [vmem:[%s2] sm:$0x1]
    %v28 = vlaneseq
    %v29 = vshrl.u32 %v28, 7
    %v30 = vsub.s32 0, %v29
    %v31 = vrot.slane %v26, %v30
    %vm33 = vcmask 261120
    %v35 = vsel %vm33, %v21, 0
    %37 = vmatprep.subr.mxu0 0.0
    %v38 = vand.u32 %v22, 4294901760
    %39 = vmatpush1.msra.mxu0 %v38
    %40 = vmatprep.subr.mxu0 0.0
    %v41 = vand.u32 %v23, 4294901760
    %42 = vmatpush1.msra.mxu0 %v41
    %43 = vmatprep.subr.mxu0 0.0
    %v44 = vand.u32 %v24, 4294901760
    %45 = vmatpush1.msra.mxu0 %v44
    %46 = vmatprep.subr.mxu0 0.0
    %v47 = vand.u32 %v25, 4294901760
    %48 = vmatpush1.msra.mxu0 %v47
    %49 = vmatprep.subr.mxu0 0.0
    %50 = vmatpush1.msra.mxu0 0.0
    %51 = vmatprep.subr.mxu0 0.0
    %52 = vmatpush1.msra.mxu0 0.0
    %53 = vmatprep.subr.mxu0 0.0
    %54 = vmatpush1.msra.mxu0 0.0
    %55 = vmatprep.subr.mxu0 0.0
    %56 = vmatpush1.msra.mxu0 0.0
    %57 = vmatprep.subr.mxu0 0.0
    %58 = vmatpush1.msra.mxu0 0.0
    %59 = vmatprep.subr.mxu0 0.0
    %60 = vmatpush1.msra.mxu0 0.0
    %61 = vmatprep.subr.mxu0 0.0
    %62 = vmatpush1.msra.mxu0 0.0
    %63 = vmatprep.subr.mxu0 0.0
    %64 = vmatpush1.msra.mxu0 0.0
    %65 = vmatprep.subr.mxu0 0.0
    %66 = vmatpush1.msra.mxu0 0.0
    %67 = vmatprep.subr.mxu0 0.0
    %68 = vmatpush1.msra.mxu0 0.0
    %69 = vmatprep.subr.mxu0 0.0
    %70 = vmatpush1.msra.mxu0 0.0
    %71 = vmatprep.subr.mxu0 0.0
    %72 = vmatpush1.msra.mxu0 0.0
    %73 = vmatprep.subr.mxu0 0.0
    %74 = vmatpush1.msra.mxu0 0.0
    %75 = vmatprep.subr.mxu0 0.0
    %76 = vmatpush1.msra.mxu0 0.0
    %77 = vmatprep.subr.mxu0 0.0
    %78 = vmatpush1.msra.mxu0 0.0
    %79 = vmatprep.subr.mxu0 0.0
    %80 = vmatpush1.msra.mxu0 0.0
    %81 = vmatprep.subr.mxu0 0.0
    %82 = vmatpush1.msra.mxu0 0.0
    %83 = vmatprep.subr.mxu0 0.0
    %84 = vmatpush1.msra.mxu0 0.0
    %85 = vmatprep.subr.mxu0 0.0
    %86 = vmatpush1.msra.mxu0 0.0
    %87 = vmatprep.subr.mxu0 0.0
    %88 = vmatpush1.msra.mxu0 0.0
    %89 = vmatprep.subr.mxu0 0.0
    %90 = vmatpush1.msra.mxu0 0.0
    %91 = vmatprep.subr.mxu0 0.0
    %92 = vmatpush1.msra.mxu0 0.0
    %93 = vmatprep.subr.mxu0 0.0
    %94 = vmatpush1.msra.mxu0 0.0
    %95 = vmatprep.subr.mxu0 0.0
    %96 = vmatpush1.msra.mxu0 0.0
    %97 = vmatprep.subr.mxu0 0.0
    %98 = vmatpush1.msra.mxu0 0.0
    %99 = vmatprep.subr.mxu0 0.0
    %100 = vmatpush1.msra.mxu0 0.0
    %101 = vmatprep.subr.mxu0 0.0
    %102 = vmatpush1.msra.mxu0 0.0
    %103 = vmatprep.subr.mxu0 0.0
    %104 = vmatpush1.msra.mxu0 0.0
    %105 = vmatprep.mubr.f32.mxu0 0.0
    %v106 = vand.u32 %v35, 4294901760
    %v107 = vsub.f32 %v35, %v106
    %v108 = vand.u32 %v107, 4294901760
    %v109 = vsub.f32 %v107, %v108
    %v110 = vand.u32 %v109, 4294901760
    %111 = vmatmul.mubr.f32.gmra.mrb[0].mxu0 %v110
    %v112 = vpop.f32.mrb[0].mxu0
    %v113 = vadd.f32 %v31, %v112
    %v114 = vpop.f32.mrb[0].mxu0
    %115 = vdwg.mxu0
    %116 = vmatprep.subr.mxu0 0.0
    %v117 = vand.u32 %v22, 4294901760
    %v118 = vsub.f32 %v22, %v117
    %v119 = vand.u32 %v118, 4294901760
    %v120 = vsub.f32 %v118, %v119
    %v121 = vand.u32 %v120, 4294901760
    %122 = vmatpush1.msra.mxu0 %v121
    %123 = vmatprep.subr.mxu0 0.0
    %v124 = vand.u32 %v23, 4294901760
    %v125 = vsub.f32 %v23, %v124
    %v126 = vand.u32 %v125, 4294901760
    %v127 = vsub.f32 %v125, %v126
    %v128 = vand.u32 %v127, 4294901760
    %129 = vmatpush1.msra.mxu0 %v128
    %130 = vmatprep.subr.mxu0 0.0
    %v131 = vand.u32 %v24, 4294901760
    %v132 = vsub.f32 %v24, %v131
    %v133 = vand.u32 %v132, 4294901760
    %v134 = vsub.f32 %v132, %v133
    %v135 = vand.u32 %v134, 4294901760
    %136 = vmatpush1.msra.mxu0 %v135
    %137 = vmatprep.subr.mxu0 0.0
    %v138 = vand.u32 %v25, 4294901760
    %v139 = vsub.f32 %v25, %v138
    %v140 = vand.u32 %v139, 4294901760
    %v141 = vsub.f32 %v139, %v140
    %v142 = vand.u32 %v141, 4294901760
    %143 = vmatpush1.msra.mxu0 %v142
    %144 = vmatprep.subr.mxu0 0.0
    %145 = vmatpush1.msra.mxu0 0.0
    %146 = vmatprep.subr.mxu0 0.0
    %147 = vmatpush1.msra.mxu0 0.0
    %148 = vmatprep.subr.mxu0 0.0
    %149 = vmatpush1.msra.mxu0 0.0
    %150 = vmatprep.subr.mxu0 0.0
    %151 = vmatpush1.msra.mxu0 0.0
    %152 = vmatprep.subr.mxu0 0.0
    %153 = vmatpush1.msra.mxu0 0.0
    %154 = vmatprep.subr.mxu0 0.0
    %155 = vmatpush1.msra.mxu0 0.0
    %156 = vmatprep.subr.mxu0 0.0
    %157 = vmatpush1.msra.mxu0 0.0
    %158 = vmatprep.subr.mxu0 0.0
    %159 = vmatpush1.msra.mxu0 0.0
    %160 = vmatprep.subr.mxu0 0.0
    %161 = vmatpush1.msra.mxu0 0.0
    %162 = vmatprep.subr.mxu0 0.0
    %163 = vmatpush1.msra.mxu0 0.0
    %164 = vmatprep.subr.mxu0 0.0
    %165 = vmatpush1.msra.mxu0 0.0
    %166 = vmatprep.subr.mxu0 0.0
    %167 = vmatpush1.msra.mxu0 0.0
    %168 = vmatprep.subr.mxu0 0.0
    %169 = vmatpush1.msra.mxu0 0.0
    %170 = vmatprep.subr.mxu0 0.0
    %171 = vmatpush1.msra.mxu0 0.0
    %172 = vmatprep.subr.mxu0 0.0
    %173 = vmatpush1.msra.mxu0 0.0
    %174 = vmatprep.subr.mxu0 0.0
    %175 = vmatpush1.msra.mxu0 0.0
    %176 = vmatprep.subr.mxu0 0.0
    %177 = vmatpush1.msra.mxu0 0.0
    %178 = vmatprep.subr.mxu0 0.0
    %179 = vmatpush1.msra.mxu0 0.0
    %180 = vmatprep.subr.mxu0 0.0
    %181 = vmatpush1.msra.mxu0 0.0
    %182 = vmatprep.subr.mxu0 0.0
    %183 = vmatpush1.msra.mxu0 0.0
    %184 = vmatprep.subr.mxu0 0.0
    %185 = vmatpush1.msra.mxu0 0.0
    %186 = vmatprep.subr.mxu0 0.0
    %187 = vmatpush1.msra.mxu0 0.0
    %188 = vmatprep.subr.mxu0 0.0
    %189 = vmatpush1.msra.mxu0 0.0
    %190 = vmatprep.subr.mxu0 0.0
    %191 = vmatpush1.msra.mxu0 0.0
    %192 = vmatprep.subr.mxu0 0.0
    %193 = vmatpush1.msra.mxu0 0.0
    %194 = vmatprep.subr.mxu0 0.0
    %195 = vmatpush1.msra.mxu0 0.0
    %196 = vmatprep.subr.mxu0 0.0
    %197 = vmatpush1.msra.mxu0 0.0
    %198 = vmatprep.subr.mxu0 0.0
    %199 = vmatpush1.msra.mxu0 0.0
    %200 = vmatprep.mubr.f32.mxu0 0.0
    %v201 = vand.u32 %v35, 4294901760
    %202 = vmatmul.mubr.f32.gmra.mrb[0].mxu0 %v201
    %v203 = vpop.f32.mrb[0].mxu0
    %v204 = vadd.f32 %v113, %v203
    %v205 = vpop.f32.mrb[0].mxu0
    %206 = vdwg.mxu0
    %207 = vmatprep.subr.mxu0 0.0
    %v208 = vand.u32 %v22, 4294901760
    %v209 = vsub.f32 %v22, %v208
    %210 = vmatpush1.msra.mxu0 %v209
    %211 = vmatprep.subr.mxu0 0.0
    %v212 = vand.u32 %v23, 4294901760
    %v213 = vsub.f32 %v23, %v212
    %214 = vmatpush1.msra.mxu0 %v213
    %215 = vmatprep.subr.mxu0 0.0
    %v216 = vand.u32 %v24, 4294901760
    %v217 = vsub.f32 %v24, %v216
    %218 = vmatpush1.msra.mxu0 %v217
    %219 = vmatprep.subr.mxu0 0.0
    %v220 = vand.u32 %v25, 4294901760
    %v221 = vsub.f32 %v25, %v220
    %222 = vmatpush1.msra.mxu0 %v221
    %223 = vmatprep.subr.mxu0 0.0
    %224 = vmatpush1.msra.mxu0 0.0
    %225 = vmatprep.subr.mxu0 0.0
    %226 = vmatpush1.msra.mxu0 0.0
    %227 = vmatprep.subr.mxu0 0.0
    %228 = vmatpush1.msra.mxu0 0.0
    %229 = vmatprep.subr.mxu0 0.0
    %230 = vmatpush1.msra.mxu0 0.0
    %231 = vmatprep.subr.mxu0 0.0
    %232 = vmatpush1.msra.mxu0 0.0
    %233 = vmatprep.subr.mxu0 0.0
    %234 = vmatpush1.msra.mxu0 0.0
    %235 = vmatprep.subr.mxu0 0.0
    %236 = vmatpush1.msra.mxu0 0.0
    %237 = vmatprep.subr.mxu0 0.0
    %238 = vmatpush1.msra.mxu0 0.0
    %239 = vmatprep.subr.mxu0 0.0
    %240 = vmatpush1.msra.mxu0 0.0
    %241 = vmatprep.subr.mxu0 0.0
    %242 = vmatpush1.msra.mxu0 0.0
    %243 = vmatprep.subr.mxu0 0.0
    %244 = vmatpush1.msra.mxu0 0.0
    %245 = vmatprep.subr.mxu0 0.0
    %246 = vmatpush1.msra.mxu0 0.0
    %247 = vmatprep.subr.mxu0 0.0
    %248 = vmatpush1.msra.mxu0 0.0
    %249 = vmatprep.subr.mxu0 0.0
    %250 = vmatpush1.msra.mxu0 0.0
    %251 = vmatprep.subr.mxu0 0.0
    %252 = vmatpush1.msra.mxu0 0.0
    %253 = vmatprep.subr.mxu0 0.0
    %254 = vmatpush1.msra.mxu0 0.0
    %255 = vmatprep.subr.mxu0 0.0
    %256 = vmatpush1.msra.mxu0 0.0
    %257 = vmatprep.subr.mxu0 0.0
    %258 = vmatpush1.msra.mxu0 0.0
    %259 = vmatprep.subr.mxu0 0.0
    %260 = vmatpush1.msra.mxu0 0.0
    %261 = vmatprep.subr.mxu0 0.0
    %262 = vmatpush1.msra.mxu0 0.0
    %263 = vmatprep.subr.mxu0 0.0
    %264 = vmatpush1.msra.mxu0 0.0
    %265 = vmatprep.subr.mxu0 0.0
    %266 = vmatpush1.msra.mxu0 0.0
    %267 = vmatprep.subr.mxu0 0.0
    %268 = vmatpush1.msra.mxu0 0.0
    %269 = vmatprep.subr.mxu0 0.0
    %270 = vmatpush1.msra.mxu0 0.0
    %271 = vmatprep.subr.mxu0 0.0
    %272 = vmatpush1.msra.mxu0 0.0
    %273 = vmatprep.subr.mxu0 0.0
    %274 = vmatpush1.msra.mxu0 0.0
    %275 = vmatprep.subr.mxu0 0.0
    %276 = vmatpush1.msra.mxu0 0.0
    %277 = vmatprep.subr.mxu0 0.0
    %278 = vmatpush1.msra.mxu0 0.0
    %279 = vmatprep.mubr.f32.mxu0 0.0
    %v280 = vand.u32 %v35, 4294901760
    %v281 = vsub.f32 %v35, %v280
    %282 = vmatmul.mubr.f32.gmra.mrb[0].mxu0 %v281
    %v283 = vpop.f32.mrb[0].mxu0
    %v284 = vadd.f32 %v204, %v283
    %v285 = vpop.f32.mrb[0].mxu0
    %286 = vdwg.mxu0
    %287 = vmatprep.subr.mxu0 0.0
    %v288 = vand.u32 %v22, 4294901760
    %289 = vmatpush1.msra.mxu0 %v288
    %290 = vmatprep.subr.mxu0 0.0
    %v291 = vand.u32 %v23, 4294901760
    %292 = vmatpush1.msra.mxu0 %v291
    %293 = vmatprep.subr.mxu0 0.0
    %v294 = vand.u32 %v24, 4294901760
    %295 = vmatpush1.msra.mxu0 %v294
    %296 = vmatprep.subr.mxu0 0.0
    %v297 = vand.u32 %v25, 4294901760
    %298 = vmatpush1.msra.mxu0 %v297
    %299 = vmatprep.subr.mxu0 0.0
    %300 = vmatpush1.msra.mxu0 0.0
    %301 = vmatprep.subr.mxu0 0.0
    %302 = vmatpush1.msra.mxu0 0.0
    %303 = vmatprep.subr.mxu0 0.0
    %304 = vmatpush1.msra.mxu0 0.0
    %305 = vmatprep.subr.mxu0 0.0
    %306 = vmatpush1.msra.mxu0 0.0
    %307 = vmatprep.subr.mxu0 0.0
    %308 = vmatpush1.msra.mxu0 0.0
    %309 = vmatprep.subr.mxu0 0.0
    %310 = vmatpush1.msra.mxu0 0.0
    %311 = vmatprep.subr.mxu0 0.0
    %312 = vmatpush1.msra.mxu0 0.0
    %313 = vmatprep.subr.mxu0 0.0
    %314 = vmatpush1.msra.mxu0 0.0
    %315 = vmatprep.subr.mxu0 0.0
    %316 = vmatpush1.msra.mxu0 0.0
    %317 = vmatprep.subr.mxu0 0.0
    %318 = vmatpush1.msra.mxu0 0.0
    %319 = vmatprep.subr.mxu0 0.0
    %320 = vmatpush1.msra.mxu0 0.0
    %321 = vmatprep.subr.mxu0 0.0
    %322 = vmatpush1.msra.mxu0 0.0
    %323 = vmatprep.subr.mxu0 0.0
    %324 = vmatpush1.msra.mxu0 0.0
    %325 = vmatprep.subr.mxu0 0.0
    %326 = vmatpush1.msra.mxu0 0.0
    %327 = vmatprep.subr.mxu0 0.0
    %328 = vmatpush1.msra.mxu0 0.0
    %329 = vmatprep.subr.mxu0 0.0
    %330 = vmatpush1.msra.mxu0 0.0
    %331 = vmatprep.subr.mxu0 0.0
    %332 = vmatpush1.msra.mxu0 0.0
    %333 = vmatprep.subr.mxu0 0.0
    %334 = vmatpush1.msra.mxu0 0.0
    %335 = vmatprep.subr.mxu0 0.0
    %336 = vmatpush1.msra.mxu0 0.0
    %337 = vmatprep.subr.mxu0 0.0
    %338 = vmatpush1.msra.mxu0 0.0
    %339 = vmatprep.subr.mxu0 0.0
    %340 = vmatpush1.msra.mxu0 0.0
    %341 = vmatprep.subr.mxu0 0.0
    %342 = vmatpush1.msra.mxu0 0.0
    %343 = vmatprep.subr.mxu0 0.0
    %344 = vmatpush1.msra.mxu0 0.0
    %345 = vmatprep.subr.mxu0 0.0
    %346 = vmatpush1.msra.mxu0 0.0
    %347 = vmatprep.subr.mxu0 0.0
    %348 = vmatpush1.msra.mxu0 0.0
    %349 = vmatprep.subr.mxu0 0.0
    %350 = vmatpush1.msra.mxu0 0.0
    %351 = vmatprep.subr.mxu0 0.0
    %352 = vmatpush1.msra.mxu0 0.0
    %353 = vmatprep.subr.mxu0 0.0
    %354 = vmatpush1.msra.mxu0 0.0
    %355 = vmatprep.mubr.f32.mxu0 0.0
    %v356 = vand.u32 %v35, 4294901760
    %v357 = vsub.f32 %v35, %v356
    %v358 = vand.u32 %v357, 4294901760
    %359 = vmatmul.mubr.f32.gmra.mrb[0].mxu0 %v358
    %v360 = vpop.f32.mrb[0].mxu0
    %v361 = vadd.f32 %v284, %v360
    %v362 = vpop.f32.mrb[0].mxu0
    %363 = vdwg.mxu0
    %364 = vmatprep.subr.mxu0 0.0
    %v365 = vand.u32 %v22, 4294901760
    %v366 = vsub.f32 %v22, %v365
    %v367 = vand.u32 %v366, 4294901760
    %368 = vmatpush1.msra.mxu0 %v367
    %369 = vmatprep.subr.mxu0 0.0
    %v370 = vand.u32 %v23, 4294901760
    %v371 = vsub.f32 %v23, %v370
    %v372 = vand.u32 %v371, 4294901760
    %373 = vmatpush1.msra.mxu0 %v372
    %374 = vmatprep.subr.mxu0 0.0
    %v375 = vand.u32 %v24, 4294901760
    %v376 = vsub.f32 %v24, %v375
    %v377 = vand.u32 %v376, 4294901760
    %378 = vmatpush1.msra.mxu0 %v377
    %379 = vmatprep.subr.mxu0 0.0
    %v380 = vand.u32 %v25, 4294901760
    %v381 = vsub.f32 %v25, %v380
    %v382 = vand.u32 %v381, 4294901760
    %383 = vmatpush1.msra.mxu0 %v382
    %384 = vmatprep.subr.mxu0 0.0
    %385 = vmatpush1.msra.mxu0 0.0
    %386 = vmatprep.subr.mxu0 0.0
    %387 = vmatpush1.msra.mxu0 0.0
    %388 = vmatprep.subr.mxu0 0.0
    %389 = vmatpush1.msra.mxu0 0.0
    %390 = vmatprep.subr.mxu0 0.0
    %391 = vmatpush1.msra.mxu0 0.0
    %392 = vmatprep.subr.mxu0 0.0
    %393 = vmatpush1.msra.mxu0 0.0
    %394 = vmatprep.subr.mxu0 0.0
    %395 = vmatpush1.msra.mxu0 0.0
    %396 = vmatprep.subr.mxu0 0.0
    %397 = vmatpush1.msra.mxu0 0.0
    %398 = vmatprep.subr.mxu0 0.0
    %399 = vmatpush1.msra.mxu0 0.0
    %400 = vmatprep.subr.mxu0 0.0
    %401 = vmatpush1.msra.mxu0 0.0
    %402 = vmatprep.subr.mxu0 0.0
    %403 = vmatpush1.msra.mxu0 0.0
    %404 = vmatprep.subr.mxu0 0.0
    %405 = vmatpush1.msra.mxu0 0.0
    %406 = vmatprep.subr.mxu0 0.0
    %407 = vmatpush1.msra.mxu0 0.0
    %408 = vmatprep.subr.mxu0 0.0
    %409 = vmatpush1.msra.mxu0 0.0
    %410 = vmatprep.subr.mxu0 0.0
    %411 = vmatpush1.msra.mxu0 0.0
    %412 = vmatprep.subr.mxu0 0.0
    %413 = vmatpush1.msra.mxu0 0.0
    %414 = vmatprep.subr.mxu0 0.0
    %415 = vmatpush1.msra.mxu0 0.0
    %416 = vmatprep.subr.mxu0 0.0
    %417 = vmatpush1.msra.mxu0 0.0
    %418 = vmatprep.subr.mxu0 0.0
    %419 = vmatpush1.msra.mxu0 0.0
    %420 = vmatprep.subr.mxu0 0.0
    %421 = vmatpush1.msra.mxu0 0.0
    %422 = vmatprep.subr.mxu0 0.0
    %423 = vmatpush1.msra.mxu0 0.0
    %424 = vmatprep.subr.mxu0 0.0
    %425 = vmatpush1.msra.mxu0 0.0
    %426 = vmatprep.subr.mxu0 0.0
    %427 = vmatpush1.msra.mxu0 0.0
    %428 = vmatprep.subr.mxu0 0.0
    %429 = vmatpush1.msra.mxu0 0.0
    %430 = vmatprep.subr.mxu0 0.0
    %431 = vmatpush1.msra.mxu0 0.0
    %432 = vmatprep.subr.mxu0 0.0
    %433 = vmatpush1.msra.mxu0 0.0
    %434 = vmatprep.subr.mxu0 0.0
    %435 = vmatpush1.msra.mxu0 0.0
    %436 = vmatprep.subr.mxu0 0.0
    %437 = vmatpush1.msra.mxu0 0.0
    %438 = vmatprep.subr.mxu0 0.0
    %439 = vmatpush1.msra.mxu0 0.0
    %440 = vmatprep.mubr.f32.mxu0 0.0
    %v441 = vand.u32 %v35, 4294901760
    %442 = vmatmul.mubr.f32.gmra.mrb[0].mxu0 %v441
    %v443 = vpop.f32.mrb[0].mxu0
    %v444 = vadd.f32 %v361, %v443
    %v445 = vpop.f32.mrb[0].mxu0
    %446 = vdwg.mxu0
    %447 = vmatprep.subr.mxu0 0.0
    %v448 = vand.u32 %v22, 4294901760
    %449 = vmatpush1.msra.mxu0 %v448
    %450 = vmatprep.subr.mxu0 0.0
    %v451 = vand.u32 %v23, 4294901760
    %452 = vmatpush1.msra.mxu0 %v451
    %453 = vmatprep.subr.mxu0 0.0
    %v454 = vand.u32 %v24, 4294901760
    %455 = vmatpush1.msra.mxu0 %v454
    %456 = vmatprep.subr.mxu0 0.0
    %v457 = vand.u32 %v25, 4294901760
    %458 = vmatpush1.msra.mxu0 %v457
    %459 = vmatprep.subr.mxu0 0.0
    %460 = vmatpush1.msra.mxu0 0.0
    %461 = vmatprep.subr.mxu0 0.0
    %462 = vmatpush1.msra.mxu0 0.0
    %463 = vmatprep.subr.mxu0 0.0
    %464 = vmatpush1.msra.mxu0 0.0
    %465 = vmatprep.subr.mxu0 0.0
    %466 = vmatpush1.msra.mxu0 0.0
    %467 = vmatprep.subr.mxu0 0.0
    %468 = vmatpush1.msra.mxu0 0.0
    %469 = vmatprep.subr.mxu0 0.0
    %470 = vmatpush1.msra.mxu0 0.0
    %471 = vmatprep.subr.mxu0 0.0
    %472 = vmatpush1.msra.mxu0 0.0
    %473 = vmatprep.subr.mxu0 0.0
    %474 = vmatpush1.msra.mxu0 0.0
    %475 = vmatprep.subr.mxu0 0.0
    %476 = vmatpush1.msra.mxu0 0.0
    %477 = vmatprep.subr.mxu0 0.0
    %478 = vmatpush1.msra.mxu0 0.0
    %479 = vmatprep.subr.mxu0 0.0
    %480 = vmatpush1.msra.mxu0 0.0
    %481 = vmatprep.subr.mxu0 0.0
    %482 = vmatpush1.msra.mxu0 0.0
    %483 = vmatprep.subr.mxu0 0.0
    %484 = vmatpush1.msra.mxu0 0.0
    %485 = vmatprep.subr.mxu0 0.0
    %486 = vmatpush1.msra.mxu0 0.0
    %487 = vmatprep.subr.mxu0 0.0
    %488 = vmatpush1.msra.mxu0 0.0
    %489 = vmatprep.subr.mxu0 0.0
    %490 = vmatpush1.msra.mxu0 0.0
    %491 = vmatprep.subr.mxu0 0.0
    %492 = vmatpush1.msra.mxu0 0.0
    %493 = vmatprep.subr.mxu0 0.0
    %494 = vmatpush1.msra.mxu0 0.0
    %495 = vmatprep.subr.mxu0 0.0
    %496 = vmatpush1.msra.mxu0 0.0
    %497 = vmatprep.subr.mxu0 0.0
    %498 = vmatpush1.msra.mxu0 0.0
    %499 = vmatprep.subr.mxu0 0.0
    %500 = vmatpush1.msra.mxu0 0.0
    %501 = vmatprep.subr.mxu0 0.0
    %502 = vmatpush1.msra.mxu0 0.0
    %503 = vmatprep.subr.mxu0 0.0
    %504 = vmatpush1.msra.mxu0 0.0
    %505 = vmatprep.subr.mxu0 0.0
    %506 = vmatpush1.msra.mxu0 0.0
    %507 = vmatprep.subr.mxu0 0.0
    %508 = vmatpush1.msra.mxu0 0.0
    %509 = vmatprep.subr.mxu0 0.0
    %510 = vmatpush1.msra.mxu0 0.0
    %511 = vmatprep.subr.mxu0 0.0
    %512 = vmatpush1.msra.mxu0 0.0
    %513 = vmatprep.subr.mxu0 0.0
    %514 = vmatpush1.msra.mxu0 0.0
    %515 = vmatprep.mubr.f32.mxu0 0.0
    %v516 = vand.u32 %v35, 4294901760
    %517 = vmatmul.mubr.f32.gmra.mrb[0].mxu0 %v516
    %v518 = vpop.f32.mrb[0].mxu0
    %v519 = vadd.f32 %v444, %v518
    %v520 = vpop.f32.mrb[0].mxu0
    %521 = vdwg.mxu0
    %v522 = vmax.f32 %v519, 0.0
    %v523 = vld [vmem:[%s3] sm:$0xff]
    %v524 = vld [vmem:[%s3 + $0x8] sm:$0xff]
    %v525 = vld [vmem:[%s3 + $0x10] sm:$0xff]
    %v526 = vld [vmem:[%s3 + $0x18] sm:$0xff]
    %v527 = vld [vmem:[%s3 + $0x20] sm:$0xff]
    %v528 = vld [vmem:[%s3 + $0x28] sm:$0xff]
    %v529 = vld [vmem:[%s3 + $0x30] sm:$0xff]
    %v530 = vld [vmem:[%s3 + $0x38] sm:$0xff]
    %v531 = vld [vmem:[%s3 + $0x40] sm:$0xff]
    %v532 = vld [vmem:[%s3 + $0x48] sm:$0xff]
    %v533 = vld [vmem:[%s3 + $0x50] sm:$0xff]
    %v534 = vld [vmem:[%s3 + $0x58] sm:$0xff]
    %v535 = vld [vmem:[%s3 + $0x60] sm:$0xff]
    %v536 = vld [vmem:[%s3 + $0x68] sm:$0xff]
    %v537 = vld [vmem:[%s3 + $0x70] sm:$0xff]
    %v538 = vld [vmem:[%s3 + $0x78] sm:$0xff]
    %v539 = vld [vmem:[%s4] sm:$0x1]
    %v541 = vlaneseq
    %v542 = vshrl.u32 %v541, 7
    %v543 = vsub.s32 0, %v542
    %v544 = vrot.slane %v539, %v543
    %546 = vmatprep.subr.mxu0 0.0
    %v547 = vand.u32 %v523, 4294901760
    %548 = vmatpush1.msra.mxu0 %v547
    %549 = vmatprep.subr.mxu0 0.0
    %v550 = vand.u32 %v524, 4294901760
    %551 = vmatpush1.msra.mxu0 %v550
    %552 = vmatprep.subr.mxu0 0.0
    %v553 = vand.u32 %v525, 4294901760
    %554 = vmatpush1.msra.mxu0 %v553
    %555 = vmatprep.subr.mxu0 0.0
    %v556 = vand.u32 %v526, 4294901760
    %557 = vmatpush1.msra.mxu0 %v556
    %558 = vmatprep.subr.mxu0 0.0
    %v559 = vand.u32 %v527, 4294901760
    %560 = vmatpush1.msra.mxu0 %v559
    %561 = vmatprep.subr.mxu0 0.0
    %v562 = vand.u32 %v528, 4294901760
    %563 = vmatpush1.msra.mxu0 %v562
    %564 = vmatprep.subr.mxu0 0.0
    %v565 = vand.u32 %v529, 4294901760
    %566 = vmatpush1.msra.mxu0 %v565
    %567 = vmatprep.subr.mxu0 0.0
    %v568 = vand.u32 %v530, 4294901760
    %569 = vmatpush1.msra.mxu0 %v568
    %570 = vmatprep.subr.mxu0 0.0
    %v571 = vand.u32 %v531, 4294901760
    %572 = vmatpush1.msra.mxu0 %v571
    %573 = vmatprep.subr.mxu0 0.0
    %v574 = vand.u32 %v532, 4294901760
    %575 = vmatpush1.msra.mxu0 %v574
    %576 = vmatprep.subr.mxu0 0.0
    %v577 = vand.u32 %v533, 4294901760
    %578 = vmatpush1.msra.mxu0 %v577
    %579 = vmatprep.subr.mxu0 0.0
    %v580 = vand.u32 %v534, 4294901760
    %581 = vmatpush1.msra.mxu0 %v580
    %582 = vmatprep.subr.mxu0 0.0
    %v583 = vand.u32 %v535, 4294901760
    %584 = vmatpush1.msra.mxu0 %v583
    %585 = vmatprep.subr.mxu0 0.0
    %v586 = vand.u32 %v536, 4294901760
    %587 = vmatpush1.msra.mxu0 %v586
    %588 = vmatprep.subr.mxu0 0.0
    %v589 = vand.u32 %v537, 4294901760
    %590 = vmatpush1.msra.mxu0 %v589
    %591 = vmatprep.subr.mxu0 0.0
    %v592 = vand.u32 %v538, 4294901760
    %593 = vmatpush1.msra.mxu0 %v592
    %594 = vmatprep.subr.mxu0 0.0
    %595 = vmatpush1.msra.mxu0 0.0
    %596 = vmatprep.subr.mxu0 0.0
    %597 = vmatpush1.msra.mxu0 0.0
    %598 = vmatprep.subr.mxu0 0.0
    %599 = vmatpush1.msra.mxu0 0.0
    %600 = vmatprep.subr.mxu0 0.0
    %601 = vmatpush1.msra.mxu0 0.0
    %602 = vmatprep.subr.mxu0 0.0
    %603 = vmatpush1.msra.mxu0 0.0
    %604 = vmatprep.subr.mxu0 0.0
    %605 = vmatpush1.msra.mxu0 0.0
    %606 = vmatprep.subr.mxu0 0.0
    %607 = vmatpush1.msra.mxu0 0.0
    %608 = vmatprep.subr.mxu0 0.0
    %609 = vmatpush1.msra.mxu0 0.0
    %610 = vmatprep.subr.mxu0 0.0
    %611 = vmatpush1.msra.mxu0 0.0
    %612 = vmatprep.subr.mxu0 0.0
    %613 = vmatpush1.msra.mxu0 0.0
    %614 = vmatprep.subr.mxu0 0.0
    %615 = vmatpush1.msra.mxu0 0.0
    %616 = vmatprep.subr.mxu0 0.0
    %617 = vmatpush1.msra.mxu0 0.0
    %618 = vmatprep.subr.mxu0 0.0
    %619 = vmatpush1.msra.mxu0 0.0
    %620 = vmatprep.subr.mxu0 0.0
    %621 = vmatpush1.msra.mxu0 0.0
    %622 = vmatprep.subr.mxu0 0.0
    %623 = vmatpush1.msra.mxu0 0.0
    %624 = vmatprep.subr.mxu0 0.0
    %625 = vmatpush1.msra.mxu0 0.0
    %626 = vmatprep.mubr.f32.mxu0 0.0
    %v627 = vand.u32 %v522, 4294901760
    %v628 = vsub.f32 %v522, %v627
    %v629 = vand.u32 %v628, 4294901760
    %v630 = vsub.f32 %v628, %v629
    %v631 = vand.u32 %v630, 4294901760
    %632 = vmatmul.mubr.f32.gmra.mrb[0].mxu0 %v631
    %v633 = vpop.f32.mrb[0].mxu0
    %v634 = vadd.f32 %v544, %v633
    %v635 = vpop.f32.mrb[0].mxu0
    %636 = vdwg.mxu0
    %637 = vmatprep.subr.mxu0 0.0
    %v638 = vand.u32 %v523, 4294901760
    %v639 = vsub.f32 %v523, %v638
    %v640 = vand.u32 %v639, 4294901760
    %v641 = vsub.f32 %v639, %v640
    %v642 = vand.u32 %v641, 4294901760
    %643 = vmatpush1.msra.mxu0 %v642
    %644 = vmatprep.subr.mxu0 0.0
    %v645 = vand.u32 %v524, 4294901760
    %v646 = vsub.f32 %v524, %v645
    %v647 = vand.u32 %v646, 4294901760
    %v648 = vsub.f32 %v646, %v647
    %v649 = vand.u32 %v648, 4294901760
    %650 = vmatpush1.msra.mxu0 %v649
    %651 = vmatprep.subr.mxu0 0.0
    %v652 = vand.u32 %v525, 4294901760
    %v653 = vsub.f32 %v525, %v652
    %v654 = vand.u32 %v653, 4294901760
    %v655 = vsub.f32 %v653, %v654
    %v656 = vand.u32 %v655, 4294901760
    %657 = vmatpush1.msra.mxu0 %v656
    %658 = vmatprep.subr.mxu0 0.0
    %v659 = vand.u32 %v526, 4294901760
    %v660 = vsub.f32 %v526, %v659
    %v661 = vand.u32 %v660, 4294901760
    %v662 = vsub.f32 %v660, %v661
    %v663 = vand.u32 %v662, 4294901760
    %664 = vmatpush1.msra.mxu0 %v663
    %665 = vmatprep.subr.mxu0 0.0
    %v666 = vand.u32 %v527, 4294901760
    %v667 = vsub.f32 %v527, %v666
    %v668 = vand.u32 %v667, 4294901760
    %v669 = vsub.f32 %v667, %v668
    %v670 = vand.u32 %v669, 4294901760
    %671 = vmatpush1.msra.mxu0 %v670
    %672 = vmatprep.subr.mxu0 0.0
    %v673 = vand.u32 %v528, 4294901760
    %v674 = vsub.f32 %v528, %v673
    %v675 = vand.u32 %v674, 4294901760
    %v676 = vsub.f32 %v674, %v675
    %v677 = vand.u32 %v676, 4294901760
    %678 = vmatpush1.msra.mxu0 %v677
    %679 = vmatprep.subr.mxu0 0.0
    %v680 = vand.u32 %v529, 4294901760
    %v681 = vsub.f32 %v529, %v680
    %v682 = vand.u32 %v681, 4294901760
    %v683 = vsub.f32 %v681, %v682
    %v684 = vand.u32 %v683, 4294901760
    %685 = vmatpush1.msra.mxu0 %v684
    %686 = vmatprep.subr.mxu0 0.0
    %v687 = vand.u32 %v530, 4294901760
    %v688 = vsub.f32 %v530, %v687
    %v689 = vand.u32 %v688, 4294901760
    %v690 = vsub.f32 %v688, %v689
    %v691 = vand.u32 %v690, 4294901760
    %692 = vmatpush1.msra.mxu0 %v691
    %693 = vmatprep.subr.mxu0 0.0
    %v694 = vand.u32 %v531, 4294901760
    %v695 = vsub.f32 %v531, %v694
    %v696 = vand.u32 %v695, 4294901760
    %v697 = vsub.f32 %v695, %v696
    %v698 = vand.u32 %v697, 4294901760
    %699 = vmatpush1.msra.mxu0 %v698
    %700 = vmatprep.subr.mxu0 0.0
    %v701 = vand.u32 %v532, 4294901760
    %v702 = vsub.f32 %v532, %v701
    %v703 = vand.u32 %v702, 4294901760
    %v704 = vsub.f32 %v702, %v703
    %v705 = vand.u32 %v704, 4294901760
    %706 = vmatpush1.msra.mxu0 %v705
    %707 = vmatprep.subr.mxu0 0.0
    %v708 = vand.u32 %v533, 4294901760
    %v709 = vsub.f32 %v533, %v708
    %v710 = vand.u32 %v709, 4294901760
    %v711 = vsub.f32 %v709, %v710
    %v712 = vand.u32 %v711, 4294901760
    %713 = vmatpush1.msra.mxu0 %v712
    %714 = vmatprep.subr.mxu0 0.0
    %v715 = vand.u32 %v534, 4294901760
    %v716 = vsub.f32 %v534, %v715
    %v717 = vand.u32 %v716, 4294901760
    %v718 = vsub.f32 %v716, %v717
    %v719 = vand.u32 %v718, 4294901760
    %720 = vmatpush1.msra.mxu0 %v719
    %721 = vmatprep.subr.mxu0 0.0
    %v722 = vand.u32 %v535, 4294901760
    %v723 = vsub.f32 %v535, %v722
    %v724 = vand.u32 %v723, 4294901760
    %v725 = vsub.f32 %v723, %v724
    %v726 = vand.u32 %v725, 4294901760
    %727 = vmatpush1.msra.mxu0 %v726
    %728 = vmatprep.subr.mxu0 0.0
    %v729 = vand.u32 %v536, 4294901760
    %v730 = vsub.f32 %v536, %v729
    %v731 = vand.u32 %v730, 4294901760
    %v732 = vsub.f32 %v730, %v731
    %v733 = vand.u32 %v732, 4294901760
    %734 = vmatpush1.msra.mxu0 %v733
    %735 = vmatprep.subr.mxu0 0.0
    %v736 = vand.u32 %v537, 4294901760
    %v737 = vsub.f32 %v537, %v736
    %v738 = vand.u32 %v737, 4294901760
    %v739 = vsub.f32 %v737, %v738
    %v740 = vand.u32 %v739, 4294901760
    %741 = vmatpush1.msra.mxu0 %v740
    %742 = vmatprep.subr.mxu0 0.0
    %v743 = vand.u32 %v538, 4294901760
    %v744 = vsub.f32 %v538, %v743
    %v745 = vand.u32 %v744, 4294901760
    %v746 = vsub.f32 %v744, %v745
    %v747 = vand.u32 %v746, 4294901760
    %748 = vmatpush1.msra.mxu0 %v747
    %749 = vmatprep.subr.mxu0 0.0
    %750 = vmatpush1.msra.mxu0 0.0
    %751 = vmatprep.subr.mxu0 0.0
    %752 = vmatpush1.msra.mxu0 0.0
    %753 = vmatprep.subr.mxu0 0.0
    %754 = vmatpush1.msra.mxu0 0.0
    %755 = vmatprep.subr.mxu0 0.0
    %756 = vmatpush1.msra.mxu0 0.0
    %757 = vmatprep.subr.mxu0 0.0
    %758 = vmatpush1.msra.mxu0 0.0
    %759 = vmatprep.subr.mxu0 0.0
    %760 = vmatpush1.msra.mxu0 0.0
    %761 = vmatprep.subr.mxu0 0.0
    %762 = vmatpush1.msra.mxu0 0.0
    %763 = vmatprep.subr.mxu0 0.0
    %764 = vmatpush1.msra.mxu0 0.0
    %765 = vmatprep.subr.mxu0 0.0
    %766 = vmatpush1.msra.mxu0 0.0
    %767 = vmatprep.subr.mxu0 0.0
    %768 = vmatpush1.msra.mxu0 0.0
    %769 = vmatprep.subr.mxu0 0.0
    %770 = vmatpush1.msra.mxu0 0.0
    %771 = vmatprep.subr.mxu0 0.0
    %772 = vmatpush1.msra.mxu0 0.0
    %773 = vmatprep.subr.mxu0 0.0
    %774 = vmatpush1.msra.mxu0 0.0
    %775 = vmatprep.subr.mxu0 0.0
    %776 = vmatpush1.msra.mxu0 0.0
    %777 = vmatprep.subr.mxu0 0.0
    %778 = vmatpush1.msra.mxu0 0.0
    %779 = vmatprep.subr.mxu0 0.0
    %780 = vmatpush1.msra.mxu0 0.0
    %781 = vmatprep.mubr.f32.mxu0 0.0
    %v782 = vand.u32 %v522, 4294901760
    %783 = vmatmul.mubr.f32.gmra.mrb[0].mxu0 %v782
    %v784 = vpop.f32.mrb[0].mxu0
    %v785 = vadd.f32 %v634, %v784
    %v786 = vpop.f32.mrb[0].mxu0
    %787 = vdwg.mxu0
    %788 = vmatprep.subr.mxu0 0.0
    %v789 = vand.u32 %v523, 4294901760
    %v790 = vsub.f32 %v523, %v789
    %791 = vmatpush1.msra.mxu0 %v790
    %792 = vmatprep.subr.mxu0 0.0
    %v793 = vand.u32 %v524, 4294901760
    %v794 = vsub.f32 %v524, %v793
    %795 = vmatpush1.msra.mxu0 %v794
    %796 = vmatprep.subr.mxu0 0.0
    %v797 = vand.u32 %v525, 4294901760
    %v798 = vsub.f32 %v525, %v797
    %799 = vmatpush1.msra.mxu0 %v798
    %800 = vmatprep.subr.mxu0 0.0
    %v801 = vand.u32 %v526, 4294901760
    %v802 = vsub.f32 %v526, %v801
    %803 = vmatpush1.msra.mxu0 %v802
    %804 = vmatprep.subr.mxu0 0.0
    %v805 = vand.u32 %v527, 4294901760
    %v806 = vsub.f32 %v527, %v805
    %807 = vmatpush1.msra.mxu0 %v806
    %808 = vmatprep.subr.mxu0 0.0
    %v809 = vand.u32 %v528, 4294901760
    %v810 = vsub.f32 %v528, %v809
    %811 = vmatpush1.msra.mxu0 %v810
    %812 = vmatprep.subr.mxu0 0.0
    %v813 = vand.u32 %v529, 4294901760
    %v814 = vsub.f32 %v529, %v813
    %815 = vmatpush1.msra.mxu0 %v814
    %816 = vmatprep.subr.mxu0 0.0
    %v817 = vand.u32 %v530, 4294901760
    %v818 = vsub.f32 %v530, %v817
    %819 = vmatpush1.msra.mxu0 %v818
    %820 = vmatprep.subr.mxu0 0.0
    %v821 = vand.u32 %v531, 4294901760
    %v822 = vsub.f32 %v531, %v821
    %823 = vmatpush1.msra.mxu0 %v822
    %824 = vmatprep.subr.mxu0 0.0
    %v825 = vand.u32 %v532, 4294901760
    %v826 = vsub.f32 %v532, %v825
    %827 = vmatpush1.msra.mxu0 %v826
    %828 = vmatprep.subr.mxu0 0.0
    %v829 = vand.u32 %v533, 4294901760
    %v830 = vsub.f32 %v533, %v829
    %831 = vmatpush1.msra.mxu0 %v830
    %832 = vmatprep.subr.mxu0 0.0
    %v833 = vand.u32 %v534, 4294901760
    %v834 = vsub.f32 %v534, %v833
    %835 = vmatpush1.msra.mxu0 %v834
    %836 = vmatprep.subr.mxu0 0.0
    %v837 = vand.u32 %v535, 4294901760
    %v838 = vsub.f32 %v535, %v837
    %839 = vmatpush1.msra.mxu0 %v838
    %840 = vmatprep.subr.mxu0 0.0
    %v841 = vand.u32 %v536, 4294901760
    %v842 = vsub.f32 %v536, %v841
    %843 = vmatpush1.msra.mxu0 %v842
    %844 = vmatprep.subr.mxu0 0.0
    %v845 = vand.u32 %v537, 4294901760
    %v846 = vsub.f32 %v537, %v845
    %847 = vmatpush1.msra.mxu0 %v846
    %848 = vmatprep.subr.mxu0 0.0
    %v849 = vand.u32 %v538, 4294901760
    %v850 = vsub.f32 %v538, %v849
    %851 = vmatpush1.msra.mxu0 %v850
    %852 = vmatprep.subr.mxu0 0.0
    %853 = vmatpush1.msra.mxu0 0.0
    %854 = vmatprep.subr.mxu0 0.0
    %855 = vmatpush1.msra.mxu0 0.0
    %856 = vmatprep.subr.mxu0 0.0
    %857 = vmatpush1.msra.mxu0 0.0
    %858 = vmatprep.subr.mxu0 0.0
    %859 = vmatpush1.msra.mxu0 0.0
    %860 = vmatprep.subr.mxu0 0.0
    %861 = vmatpush1.msra.mxu0 0.0
    %862 = vmatprep.subr.mxu0 0.0
    %863 = vmatpush1.msra.mxu0 0.0
    %864 = vmatprep.subr.mxu0 0.0
    %865 = vmatpush1.msra.mxu0 0.0
    %866 = vmatprep.subr.mxu0 0.0
    %867 = vmatpush1.msra.mxu0 0.0
    %868 = vmatprep.subr.mxu0 0.0
    %869 = vmatpush1.msra.mxu0 0.0
    %870 = vmatprep.subr.mxu0 0.0
    %871 = vmatpush1.msra.mxu0 0.0
    %872 = vmatprep.subr.mxu0 0.0
    %873 = vmatpush1.msra.mxu0 0.0
    %874 = vmatprep.subr.mxu0 0.0
    %875 = vmatpush1.msra.mxu0 0.0
    %876 = vmatprep.subr.mxu0 0.0
    %877 = vmatpush1.msra.mxu0 0.0
    %878 = vmatprep.subr.mxu0 0.0
    %879 = vmatpush1.msra.mxu0 0.0
    %880 = vmatprep.subr.mxu0 0.0
    %881 = vmatpush1.msra.mxu0 0.0
    %882 = vmatprep.subr.mxu0 0.0
    %883 = vmatpush1.msra.mxu0 0.0
    %884 = vmatprep.mubr.f32.mxu0 0.0
    %v885 = vand.u32 %v522, 4294901760
    %v886 = vsub.f32 %v522, %v885
    %887 = vmatmul.mubr.f32.gmra.mrb[0].mxu0 %v886
    %v888 = vpop.f32.mrb[0].mxu0
    %v889 = vadd.f32 %v785, %v888
    %v890 = vpop.f32.mrb[0].mxu0
    %891 = vdwg.mxu0
    %892 = vmatprep.subr.mxu0 0.0
    %v893 = vand.u32 %v523, 4294901760
    %894 = vmatpush1.msra.mxu0 %v893
    %895 = vmatprep.subr.mxu0 0.0
    %v896 = vand.u32 %v524, 4294901760
    %897 = vmatpush1.msra.mxu0 %v896
    %898 = vmatprep.subr.mxu0 0.0
    %v899 = vand.u32 %v525, 4294901760
    %900 = vmatpush1.msra.mxu0 %v899
    %901 = vmatprep.subr.mxu0 0.0
    %v902 = vand.u32 %v526, 4294901760
    %903 = vmatpush1.msra.mxu0 %v902
    %904 = vmatprep.subr.mxu0 0.0
    %v905 = vand.u32 %v527, 4294901760
    %906 = vmatpush1.msra.mxu0 %v905
    %907 = vmatprep.subr.mxu0 0.0
    %v908 = vand.u32 %v528, 4294901760
    %909 = vmatpush1.msra.mxu0 %v908
    %910 = vmatprep.subr.mxu0 0.0
    %v911 = vand.u32 %v529, 4294901760
    %912 = vmatpush1.msra.mxu0 %v911
    %913 = vmatprep.subr.mxu0 0.0
    %v914 = vand.u32 %v530, 4294901760
    %915 = vmatpush1.msra.mxu0 %v914
    %916 = vmatprep.subr.mxu0 0.0
    %v917 = vand.u32 %v531, 4294901760
    %918 = vmatpush1.msra.mxu0 %v917
    %919 = vmatprep.subr.mxu0 0.0
    %v920 = vand.u32 %v532, 4294901760
    %921 = vmatpush1.msra.mxu0 %v920
    %922 = vmatprep.subr.mxu0 0.0
    %v923 = vand.u32 %v533, 4294901760
    %924 = vmatpush1.msra.mxu0 %v923
    %925 = vmatprep.subr.mxu0 0.0
    %v926 = vand.u32 %v534, 4294901760
    %927 = vmatpush1.msra.mxu0 %v926
    %928 = vmatprep.subr.mxu0 0.0
    %v929 = vand.u32 %v535, 4294901760
    %930 = vmatpush1.msra.mxu0 %v929
    %931 = vmatprep.subr.mxu0 0.0
    %v932 = vand.u32 %v536, 4294901760
    %933 = vmatpush1.msra.mxu0 %v932
    %934 = vmatprep.subr.mxu0 0.0
    %v935 = vand.u32 %v537, 4294901760
    %936 = vmatpush1.msra.mxu0 %v935
    %937 = vmatprep.subr.mxu0 0.0
    %v938 = vand.u32 %v538, 4294901760
    %939 = vmatpush1.msra.mxu0 %v938
    %940 = vmatprep.subr.mxu0 0.0
    %941 = vmatpush1.msra.mxu0 0.0
    %942 = vmatprep.subr.mxu0 0.0
    %943 = vmatpush1.msra.mxu0 0.0
    %944 = vmatprep.subr.mxu0 0.0
    %945 = vmatpush1.msra.mxu0 0.0
    %946 = vmatprep.subr.mxu0 0.0
    %947 = vmatpush1.msra.mxu0 0.0
    %948 = vmatprep.subr.mxu0 0.0
    %949 = vmatpush1.msra.mxu0 0.0
    %950 = vmatprep.subr.mxu0 0.0
    %951 = vmatpush1.msra.mxu0 0.0
    %952 = vmatprep.subr.mxu0 0.0
    %953 = vmatpush1.msra.mxu0 0.0
    %954 = vmatprep.subr.mxu0 0.0
    %955 = vmatpush1.msra.mxu0 0.0
    %956 = vmatprep.subr.mxu0 0.0
    %957 = vmatpush1.msra.mxu0 0.0
    %958 = vmatprep.subr.mxu0 0.0
    %959 = vmatpush1.msra.mxu0 0.0
    %960 = vmatprep.subr.mxu0 0.0
    %961 = vmatpush1.msra.mxu0 0.0
    %962 = vmatprep.subr.mxu0 0.0
    %963 = vmatpush1.msra.mxu0 0.0
    %964 = vmatprep.subr.mxu0 0.0
    %965 = vmatpush1.msra.mxu0 0.0
    %966 = vmatprep.subr.mxu0 0.0
    %967 = vmatpush1.msra.mxu0 0.0
    %968 = vmatprep.subr.mxu0 0.0
    %969 = vmatpush1.msra.mxu0 0.0
    %970 = vmatprep.subr.mxu0 0.0
    %971 = vmatpush1.msra.mxu0 0.0
    %972 = vmatprep.mubr.f32.mxu0 0.0
    %v973 = vand.u32 %v522, 4294901760
    %v974 = vsub.f32 %v522, %v973
    %v975 = vand.u32 %v974, 4294901760
    %976 = vmatmul.mubr.f32.gmra.mrb[0].mxu0 %v975
    %v977 = vpop.f32.mrb[0].mxu0
    %v978 = vadd.f32 %v889, %v977
    %v979 = vpop.f32.mrb[0].mxu0
    %980 = vdwg.mxu0
    %981 = vmatprep.subr.mxu0 0.0
    %v982 = vand.u32 %v523, 4294901760
    %v983 = vsub.f32 %v523, %v982
    %v984 = vand.u32 %v983, 4294901760
    %985 = vmatpush1.msra.mxu0 %v984
    %986 = vmatprep.subr.mxu0 0.0
    %v987 = vand.u32 %v524, 4294901760
    %v988 = vsub.f32 %v524, %v987
    %v989 = vand.u32 %v988, 4294901760
    %990 = vmatpush1.msra.mxu0 %v989
    %991 = vmatprep.subr.mxu0 0.0
    %v992 = vand.u32 %v525, 4294901760
    %v993 = vsub.f32 %v525, %v992
    %v994 = vand.u32 %v993, 4294901760
    %995 = vmatpush1.msra.mxu0 %v994
    %996 = vmatprep.subr.mxu0 0.0
    %v997 = vand.u32 %v526, 4294901760
    %v998 = vsub.f32 %v526, %v997
    %v999 = vand.u32 %v998, 4294901760
    %1000 = vmatpush1.msra.mxu0 %v999
    %1001 = vmatprep.subr.mxu0 0.0
    %v1002 = vand.u32 %v527, 4294901760
    %v1003 = vsub.f32 %v527, %v1002
    %v1004 = vand.u32 %v1003, 4294901760
    %1005 = vmatpush1.msra.mxu0 %v1004
    %1006 = vmatprep.subr.mxu0 0.0
    %v1007 = vand.u32 %v528, 4294901760
    %v1008 = vsub.f32 %v528, %v1007
    %v1009 = vand.u32 %v1008, 4294901760
    %1010 = vmatpush1.msra.mxu0 %v1009
    %1011 = vmatprep.subr.mxu0 0.0
    %v1012 = vand.u32 %v529, 4294901760
    %v1013 = vsub.f32 %v529, %v1012
    %v1014 = vand.u32 %v1013, 4294901760
    %1015 = vmatpush1.msra.mxu0 %v1014
    %1016 = vmatprep.subr.mxu0 0.0
    %v1017 = vand.u32 %v530, 4294901760
    %v1018 = vsub.f32 %v530, %v1017
    %v1019 = vand.u32 %v1018, 4294901760
    %1020 = vmatpush1.msra.mxu0 %v1019
    %1021 = vmatprep.subr.mxu0 0.0
    %v1022 = vand.u32 %v531, 4294901760
    %v1023 = vsub.f32 %v531, %v1022
    %v1024 = vand.u32 %v1023, 4294901760
    %1025 = vmatpush1.msra.mxu0 %v1024
    %1026 = vmatprep.subr.mxu0 0.0
    %v1027 = vand.u32 %v532, 4294901760
    %v1028 = vsub.f32 %v532, %v1027
    %v1029 = vand.u32 %v1028, 4294901760
    %1030 = vmatpush1.msra.mxu0 %v1029
    %1031 = vmatprep.subr.mxu0 0.0
    %v1032 = vand.u32 %v533, 4294901760
    %v1033 = vsub.f32 %v533, %v1032
    %v1034 = vand.u32 %v1033, 4294901760
    %1035 = vmatpush1.msra.mxu0 %v1034
    %1036 = vmatprep.subr.mxu0 0.0
    %v1037 = vand.u32 %v534, 4294901760
    %v1038 = vsub.f32 %v534, %v1037
    %v1039 = vand.u32 %v1038, 4294901760
    %1040 = vmatpush1.msra.mxu0 %v1039
    %1041 = vmatprep.subr.mxu0 0.0
    %v1042 = vand.u32 %v535, 4294901760
    %v1043 = vsub.f32 %v535, %v1042
    %v1044 = vand.u32 %v1043, 4294901760
    %1045 = vmatpush1.msra.mxu0 %v1044
    %1046 = vmatprep.subr.mxu0 0.0
    %v1047 = vand.u32 %v536, 4294901760
    %v1048 = vsub.f32 %v536, %v1047
    %v1049 = vand.u32 %v1048, 4294901760
    %1050 = vmatpush1.msra.mxu0 %v1049
    %1051 = vmatprep.subr.mxu0 0.0
    %v1052 = vand.u32 %v537, 4294901760
    %v1053 = vsub.f32 %v537, %v1052
    %v1054 = vand.u32 %v1053, 4294901760
    %1055 = vmatpush1.msra.mxu0 %v1054
    %1056 = vmatprep.subr.mxu0 0.0
    %v1057 = vand.u32 %v538, 4294901760
    %v1058 = vsub.f32 %v538, %v1057
    %v1059 = vand.u32 %v1058, 4294901760
    %1060 = vmatpush1.msra.mxu0 %v1059
    %1061 = vmatprep.subr.mxu0 0.0
    %1062 = vmatpush1.msra.mxu0 0.0
    %1063 = vmatprep.subr.mxu0 0.0
    %1064 = vmatpush1.msra.mxu0 0.0
    %1065 = vmatprep.subr.mxu0 0.0
    %1066 = vmatpush1.msra.mxu0 0.0
    %1067 = vmatprep.subr.mxu0 0.0
    %1068 = vmatpush1.msra.mxu0 0.0
    %1069 = vmatprep.subr.mxu0 0.0
    %1070 = vmatpush1.msra.mxu0 0.0
    %1071 = vmatprep.subr.mxu0 0.0
    %1072 = vmatpush1.msra.mxu0 0.0
    %1073 = vmatprep.subr.mxu0 0.0
    %1074 = vmatpush1.msra.mxu0 0.0
    %1075 = vmatprep.subr.mxu0 0.0
    %1076 = vmatpush1.msra.mxu0 0.0
    %1077 = vmatprep.subr.mxu0 0.0
    %1078 = vmatpush1.msra.mxu0 0.0
    %1079 = vmatprep.subr.mxu0 0.0
    %1080 = vmatpush1.msra.mxu0 0.0
    %1081 = vmatprep.subr.mxu0 0.0
    %1082 = vmatpush1.msra.mxu0 0.0
    %1083 = vmatprep.subr.mxu0 0.0
    %1084 = vmatpush1.msra.mxu0 0.0
    %1085 = vmatprep.subr.mxu0 0.0
    %1086 = vmatpush1.msra.mxu0 0.0
    %1087 = vmatprep.subr.mxu0 0.0
    %1088 = vmatpush1.msra.mxu0 0.0
    %1089 = vmatprep.subr.mxu0 0.0
    %1090 = vmatpush1.msra.mxu0 0.0
    %1091 = vmatprep.subr.mxu0 0.0
    %1092 = vmatpush1.msra.mxu0 0.0
    %1093 = vmatprep.mubr.f32.mxu0 0.0
    %v1094 = vand.u32 %v522, 4294901760
    %1095 = vmatmul.mubr.f32.gmra.mrb[0].mxu0 %v1094
    %v1096 = vpop.f32.mrb[0].mxu0
    %v1097 = vadd.f32 %v978, %v1096
    %v1098 = vpop.f32.mrb[0].mxu0
    %1099 = vdwg.mxu0
    %1100 = vmatprep.subr.mxu0 0.0
    %v1101 = vand.u32 %v523, 4294901760
    %1102 = vmatpush1.msra.mxu0 %v1101
    %1103 = vmatprep.subr.mxu0 0.0
    %v1104 = vand.u32 %v524, 4294901760
    %1105 = vmatpush1.msra.mxu0 %v1104
    %1106 = vmatprep.subr.mxu0 0.0
    %v1107 = vand.u32 %v525, 4294901760
    %1108 = vmatpush1.msra.mxu0 %v1107
    %1109 = vmatprep.subr.mxu0 0.0
    %v1110 = vand.u32 %v526, 4294901760
    %1111 = vmatpush1.msra.mxu0 %v1110
    %1112 = vmatprep.subr.mxu0 0.0
    %v1113 = vand.u32 %v527, 4294901760
    %1114 = vmatpush1.msra.mxu0 %v1113
    %1115 = vmatprep.subr.mxu0 0.0
    %v1116 = vand.u32 %v528, 4294901760
    %1117 = vmatpush1.msra.mxu0 %v1116
    %1118 = vmatprep.subr.mxu0 0.0
    %v1119 = vand.u32 %v529, 4294901760
    %1120 = vmatpush1.msra.mxu0 %v1119
    %1121 = vmatprep.subr.mxu0 0.0
    %v1122 = vand.u32 %v530, 4294901760
    %1123 = vmatpush1.msra.mxu0 %v1122
    %1124 = vmatprep.subr.mxu0 0.0
    %v1125 = vand.u32 %v531, 4294901760
    %1126 = vmatpush1.msra.mxu0 %v1125
    %1127 = vmatprep.subr.mxu0 0.0
    %v1128 = vand.u32 %v532, 4294901760
    %1129 = vmatpush1.msra.mxu0 %v1128
    %1130 = vmatprep.subr.mxu0 0.0
    %v1131 = vand.u32 %v533, 4294901760
    %1132 = vmatpush1.msra.mxu0 %v1131
    %1133 = vmatprep.subr.mxu0 0.0
    %v1134 = vand.u32 %v534, 4294901760
    %1135 = vmatpush1.msra.mxu0 %v1134
    %1136 = vmatprep.subr.mxu0 0.0
    %v1137 = vand.u32 %v535, 4294901760
    %1138 = vmatpush1.msra.mxu0 %v1137
    %1139 = vmatprep.subr.mxu0 0.0
    %v1140 = vand.u32 %v536, 4294901760
    %1141 = vmatpush1.msra.mxu0 %v1140
    %1142 = vmatprep.subr.mxu0 0.0
    %v1143 = vand.u32 %v537, 4294901760
    %1144 = vmatpush1.msra.mxu0 %v1143
    %1145 = vmatprep.subr.mxu0 0.0
    %v1146 = vand.u32 %v538, 4294901760
    %1147 = vmatpush1.msra.mxu0 %v1146
    %1148 = vmatprep.subr.mxu0 0.0
    %1149 = vmatpush1.msra.mxu0 0.0
    %1150 = vmatprep.subr.mxu0 0.0
    %1151 = vmatpush1.msra.mxu0 0.0
    %1152 = vmatprep.subr.mxu0 0.0
    %1153 = vmatpush1.msra.mxu0 0.0
    %1154 = vmatprep.subr.mxu0 0.0
    %1155 = vmatpush1.msra.mxu0 0.0
    %1156 = vmatprep.subr.mxu0 0.0
    %1157 = vmatpush1.msra.mxu0 0.0
    %1158 = vmatprep.subr.mxu0 0.0
    %1159 = vmatpush1.msra.mxu0 0.0
    %1160 = vmatprep.subr.mxu0 0.0
    %1161 = vmatpush1.msra.mxu0 0.0
    %1162 = vmatprep.subr.mxu0 0.0
    %1163 = vmatpush1.msra.mxu0 0.0
    %1164 = vmatprep.subr.mxu0 0.0
    %1165 = vmatpush1.msra.mxu0 0.0
    %1166 = vmatprep.subr.mxu0 0.0
    %1167 = vmatpush1.msra.mxu0 0.0
    %1168 = vmatprep.subr.mxu0 0.0
    %1169 = vmatpush1.msra.mxu0 0.0
    %1170 = vmatprep.subr.mxu0 0.0
    %1171 = vmatpush1.msra.mxu0 0.0
    %1172 = vmatprep.subr.mxu0 0.0
    %1173 = vmatpush1.msra.mxu0 0.0
    %1174 = vmatprep.subr.mxu0 0.0
    %1175 = vmatpush1.msra.mxu0 0.0
    %1176 = vmatprep.subr.mxu0 0.0
    %1177 = vmatpush1.msra.mxu0 0.0
    %1178 = vmatprep.subr.mxu0 0.0
    %1179 = vmatpush1.msra.mxu0 0.0
    %1180 = vmatprep.mubr.f32.mxu0 0.0
    %v1181 = vand.u32 %v522, 4294901760
    %1182 = vmatmul.mubr.f32.gmra.mrb[0].mxu0 %v1181
    %v1183 = vpop.f32.mrb[0].mxu0
    %v1184 = vadd.f32 %v1097, %v1183
    %v1185 = vpop.f32.mrb[0].mxu0
    %1186 = vdwg.mxu0
    %vm1187 = vcmask 130048
    %1188 = vst.msk [vmem:[#allocation2] sm:$0xff] %vm1187, %v1184
    // Predicated region
    $region22: #{tpu_custom_call.1} parent=1 // pred_check
      _
    $region23: #{tpu_custom_call.1} parent=1 // pred_check_branch
      %1190 = sbr.rel (0) target = $region25
    $region24: #{tpu_custom_call.1} parent=1 // pred_region
      %s1192 = ssub.s32 128, 128
      %1193 = vsyncadd [#allocation3], %s1192
      %s1195 = sshll.u32 [#allocation2], 4
      %s1196 = int_to_ptr.vmem [resolvable:$true] %s1195
      %1198 = dma.vmem_to_hbm [thread:$0]  %s1196, 128, %s5, [#allocation3]
    $region25: #{tpu_custom_call.1} parent=1 // pred_fallthru
      _
    // Predicated region
    $region26: #{tpu_custom_call.1} parent=1 // pred_check
      _
    $region27: #{tpu_custom_call.1} parent=1 // pred_check_branch
      %1200 = sbr.rel (0) target = $region29
    $region28: #{tpu_custom_call.1} parent=1 // pred_region
      %1201 = dma.done [#allocation3], 128
    $region29: #{tpu_custom_call.1} parent=1 // pred_fallthru
      _
    %1202 = vsyncpa [#allocation3], 1

</llo_original>
